<compile_context>
chip_gen: v7x
topology: tpu7x:2x2x1
jax: 0.10.0
libtpu: 0.0.40
codegen_flags: <defaults>
</compile_context>

<pallas_src>
import functools

import jax
import jax.numpy as jnp
import numpy as np
from jax.experimental import pallas as pl
from jax.experimental.pallas import tpu as pltpu

_HIGHEST = jax.lax.Precision.HIGHEST


def _round_up(v, m):
    return (v + m - 1) // m * m


def _vmem_limit_bytes():
    """~80% of physical VMEM (≈102 MiB on v5e/v6e, ≈51 MiB on v7x)."""
    cap = 64 * 1024 * 1024  # safe fallback (≤ v7x physical, > all scoped defaults)
    try:
        info = pltpu.get_tpu_info()
        cap = int(getattr(info, "vmem_capacity_bytes", cap) or cap)
    except Exception:
        pass
    return int(cap * 0.8)


def _pick_spatial_tile(hw, c, itemsize, budget_bytes):
    """Largest 128-multiple spatial tile <= HW whose (C, tile) block fits budget."""
    if hw <= 128:
        return hw                      # full spatial dim as a single block
    c_pad = max(_round_up(c, 8), 8)    # sublane padding
    lanes = max(budget_bytes // (c_pad * itemsize), 128)
    tile = min((lanes // 128) * 128, (hw // 128) * 128)   # never exceed HW
    return max(tile, 128)


# --------------------------------------------------------------------------
# Fused single-pass kernel: pooling + channel MLP + spatial matvec + apply.
# Grid = (N,), whole (C, HW) slab resident in VMEM, x read once / written once.
# --------------------------------------------------------------------------
def _fused_kernel(x_ref, w1_ref, b1_ref, w2_ref, b2_ref, wc_ref, bc_ref,
                  o_ref, *, hw):
    x = x_ref[0].astype(jnp.float32)                               # (C, HW)
    avg = jnp.sum(x, axis=-1, keepdims=True) * jnp.float32(1.0 / hw)
    mx = jnp.max(x, axis=-1, keepdims=True)
    pooled = jnp.concatenate([avg, mx], axis=1)                    # (C, 2)
    h = jnp.dot(w1_ref[...], pooled, precision=_HIGHEST,
                preferred_element_type=jnp.float32) + b1_ref[...]  # (Cr, 2)
    h = jnp.maximum(h, 0.0)
    o = jnp.dot(w2_ref[...], h, precision=_HIGHEST,
                preferred_element_type=jnp.float32) + b2_ref[...]  # (C, 2)
    ca = jax.nn.sigmoid(o[:, 0:1] + o[:, 1:2])                     # (C, 1)
    sa = jax.nn.sigmoid(
        jnp.dot(wc_ref[...], x, precision=_HIGHEST,
                preferred_element_type=jnp.float32) + bc_ref[0])   # (1, HW)
    o_ref[0] = (x * ca * sa).astype(o_ref.dtype)


# --------------------------------------------------------------------------
# Pass 1 (fallback): chunked global avg/max pooling + channel-attention MLP.
# --------------------------------------------------------------------------
def _pool_mlp_kernel(x_ref, w1_ref, b1_ref, w2_ref, b2_ref, ca_ref,
                     sum_ref, max_ref, *, hw, tile):
    """Grid = (N, HW_chunks).  x_ref: (1, C, tile); ca_ref: (1, C, 1)."""
    k = pl.program_id(1)
    n_k = pl.num_programs(1)

    @pl.when(k == 0)
    def _init():
        sum_ref[...] = jnp.zeros(sum_ref.shape, sum_ref.dtype)
        max_ref[...] = jnp.full(max_ref.shape, -jnp.inf, max_ref.dtype)

    x = x_ref[0].astype(jnp.float32)                               # (C, tile)
    ragged = (hw % tile) != 0                                      # static

    def _accumulate(xs, xm):
        sum_ref[...] += jnp.sum(xs, axis=-1, keepdims=True)
        max_ref[...] = jnp.maximum(max_ref[...],
                                   jnp.max(xm, axis=-1, keepdims=True))

    if ragged:
        # Hot path: full chunks, no masking.
        @pl.when(k < n_k - 1)
        def _full_chunk():
            _accumulate(x, x)

        # Last chunk: out-of-bounds lanes are undefined -> mask (sum: 0, max: -inf).
        @pl.when(k == n_k - 1)
        def _last_chunk():
            lane = jax.lax.broadcasted_iota(jnp.int32, x.shape, 1)
            valid = (k * tile + lane) < hw
            _accumulate(jnp.where(valid, x, 0.0),
                        jnp.where(valid, x, -jnp.inf))
    else:
        _accumulate(x, x)

    @pl.when(k == n_k - 1)
    def _finalize():
        avg = sum_ref[...] * jnp.float32(1.0 / hw)                 # exact divisor
        pooled = jnp.concatenate([avg, max_ref[...]], axis=1)      # (C, 2)
        h = jnp.dot(w1_ref[...], pooled, precision=_HIGHEST,
                    preferred_element_type=jnp.float32) + b1_ref[...]
        h = jnp.maximum(h, 0.0)
        o = jnp.dot(w2_ref[...], h, precision=_HIGHEST,
                    preferred_element_type=jnp.float32) + b2_ref[...]
        ca = jax.nn.sigmoid(o[:, 0:1] + o[:, 1:2])                 # (C, 1)
        ca_ref[0] = ca.astype(ca_ref.dtype)


# --------------------------------------------------------------------------
# Pass 2 (fallback): spatial attention (1x1 conv C->1 on the MXU) + apply.
# --------------------------------------------------------------------------
def _apply_kernel(x_ref, ca_ref, wc_ref, bc_ref, o_ref):
    """x_ref/o_ref: (1, C, tile); ca_ref: (1, C, 1); wc_ref: (1, C); bc_ref: SMEM."""
    x = x_ref[0].astype(jnp.float32)                               # (C, tile)
    sa = jax.nn.sigmoid(
        jnp.dot(wc_ref[...], x, precision=_HIGHEST,
                preferred_element_type=jnp.float32) + bc_ref[0])   # (1, tile)
    # Out-of-bounds lanes in a ragged last chunk compute garbage per-lane only;
    # their stores are dropped by the BlockSpec machinery.
    o_ref[0] = (x * ca_ref[0] * sa).astype(o_ref.dtype)


@functools.partial(jax.jit, static_argnames=("force_two_pass", "spatial_tile"))
def cbam_forward(x, w1, b1, w2, b2, wc, bc, *, force_two_pass=False,
                 spatial_tile=None):
    """x: (N, C, H, W) float32.  Weights follow PyTorch Conv2d(1x1) shapes with
    the trailing 1x1 spatial dims dropped:
      w1: (Cr, C), b1: (Cr,), w2: (C, Cr), b2: (C,), wc: (1, C), bc: (1,)
    """
    N, C, H, W = x.shape
    Cr = w1.shape[0]
    HW = H * W
    itemsize = x.dtype.itemsize

    x_flat = x.reshape(N, C, HW)          # metadata-only reshape, no HBM copy

    # Parameter glue (tiny, plain-JAX reshapes).
    b1c = b1.reshape(Cr, 1)
    b2c = b2.reshape(C, 1)
    wc_row = wc.reshape(1, C)             # lane-dense for the MXU mat-vec
    bc_s = bc.reshape(1)                  # scalar, lives in SMEM

    vmem_limit = _vmem_limit_bytes()
    bytes_x = N * C * HW * itemsize
    weight_bytes = (2 * Cr * C + Cr + 2 * C + 1) * 4
    # Per-sample VMEM slab (with layout padding).
    slab_bytes = max(_round_up(C, 8), 8) * _round_up(HW, 128) * itemsize
    # Fused path budget: in/out blocks double-buffered + compiler temporaries
    # (~8 live slabs, conservative) + weights + margin.
    use_fused = (not force_two_pass) and (
        8 * slab_bytes + 2 * weight_bytes + (2 << 20) <= vmem_limit)

    def _cparams(sem):
        return pltpu.CompilerParams(dimension_semantics=sem,
                                    vmem_limit_bytes=vmem_limit)

    if use_fused:
        out_flat = pl.pallas_call(
            functools.partial(_fused_kernel, hw=HW),
            out_shape=jax.ShapeDtypeStruct((N, C, HW), x.dtype),
            grid=(N,),
            in_specs=[
                pl.BlockSpec((1, C, HW), lambda n: (n, 0, 0)),
                pl.BlockSpec((Cr, C), lambda n: (0, 0)),
                pl.BlockSpec((Cr, 1), lambda n: (0, 0)),
                pl.BlockSpec((C, Cr), lambda n: (0, 0)),
                pl.BlockSpec((C, 1), lambda n: (0, 0)),
                pl.BlockSpec((1, C), lambda n: (0, 0)),
                pl.BlockSpec(memory_space=pltpu.MemorySpace.SMEM),
            ],
            out_specs=pl.BlockSpec((1, C, HW), lambda n: (n, 0, 0)),
            compiler_params=_cparams(("parallel",)),
            cost_estimate=pl.CostEstimate(
                flops=(4 * C + 6) * N * HW,
                transcendentals=N * (HW + C),
                bytes_accessed=2 * bytes_x),
        )(x_flat, w1, b1c, w2, b2c, wc_row, bc_s)
        return out_flat.reshape(N, C, H, W)

    # ---------------- Two-pass fallback (large per-sample slabs) -----------
    if spatial_tile is not None:
        tile = int(spatial_tile)
        assert tile == HW or (tile % 128 == 0 and tile <= HW)
    else:
        tile = _pick_spatial_tile(HW, C, itemsize,
                                  min(8 << 20, vmem_limit // 12))
    n_k = pl.cdiv(HW, tile)

    ca = pl.pallas_call(
        functools.partial(_pool_mlp_kernel, hw=HW, tile=tile),
        out_shape=jax.ShapeDtypeStruct((N, C, 1), jnp.float32),
        grid=(N, n_k),
        in_specs=[
            pl.BlockSpec((1, C, tile), lambda n, k: (n, 0, k)),
            pl.BlockSpec((Cr, C), lambda n, k: (0, 0)),
            pl.BlockSpec((Cr, 1), lambda n, k: (0, 0)),
            pl.BlockSpec((C, Cr), lambda n, k: (0, 0)),
            pl.BlockSpec((C, 1), lambda n, k: (0, 0)),
        ],
        out_specs=pl.BlockSpec((1, C, 1), lambda n, k: (n, 0, 0)),
        scratch_shapes=[
            pltpu.VMEM((C, 1), jnp.float32),   # running sum
            pltpu.VMEM((C, 1), jnp.float32),   # running max
        ],
        compiler_params=_cparams(("parallel", "arbitrary")),
        cost_estimate=pl.CostEstimate(
            flops=2 * N * C * HW,
            transcendentals=N * C,
            bytes_accessed=bytes_x + N * C * 4),
    )(x_flat, w1, b1c, w2, b2c)

    out_flat = pl.pallas_call(
        _apply_kernel,
        out_shape=jax.ShapeDtypeStruct((N, C, HW), x.dtype),
        grid=(N, n_k),
        in_specs=[
            pl.BlockSpec((1, C, tile), lambda n, k: (n, 0, k)),
            pl.BlockSpec((1, C, 1), lambda n, k: (n, 0, 0)),
            pl.BlockSpec((1, C), lambda n, k: (0, 0)),
            pl.BlockSpec(memory_space=pltpu.MemorySpace.SMEM),
        ],
        out_specs=pl.BlockSpec((1, C, tile), lambda n, k: (n, 0, k)),
        compiler_params=_cparams(("parallel", "parallel")),
        cost_estimate=pl.CostEstimate(
            flops=(4 * C + 4) * N * HW,
            transcendentals=N * HW,
            bytes_accessed=2 * bytes_x + N * C * 4),
    )(x_flat, ca, wc_row, bc_s)

    return out_flat.reshape(N, C, H, W)


def cbam_reference(x, w1, b1, w2, b2, wc, bc):
    """Pure-JAX reference matching the PyTorch module semantics."""
    avg = x.mean(axis=(2, 3))                       # (N, C)
    mxv = x.max(axis=(2, 3))                        # (N, C)

    def mlp(v):
        h = jnp.maximum(jnp.dot(v, w1.T, precision=_HIGHEST) + b1, 0.0)
        return jnp.dot(h, w2.T, precision=_HIGHEST) + b2

    ca = jax.nn.sigmoid(mlp(avg) + mlp(mxv))        # (N, C)
    sa = jax.nn.sigmoid(
        jnp.einsum("nchw,c->nhw", x, wc[0], precision=_HIGHEST) + bc[0])
    return x * ca[:, :, None, None] * sa[:, None, :, :]


if __name__ == "__main__":
    reduction = 16
    # (shape, forced spatial tile for the two-pass coverage run)
    #   (2,4,16,16): HW=256  -> lane-aligned, 2 full chunks
    #   (2,8,14,14): HW=196  -> ragged last chunk (masked sum/max, dropped stores)
    #   (1,4,48,48): HW=2304 -> 9-chunk running accumulation
    test_cases = [((2, 4, 16, 16), 128),
                  ((2, 8, 14, 14), 128),
                  ((1, 4, 48, 48), 256)]

    key = jax.random.PRNGKey(0)
    for (N, C, H, W), tile in test_cases:
        Cr = max(C // reduction, 1)
        key, kx, k1, k2, k3, k4, k5, k6 = jax.random.split(key, 8)

        x = jax.random.normal(kx, (N, C, H, W), dtype=jnp.float32)
        w1 = jax.random.normal(k1, (Cr, C), dtype=jnp.float32) * 0.5   # fc1.weight
        b1 = jax.random.normal(k2, (Cr,), dtype=jnp.float32) * 0.1     # fc1.bias
        w2 = jax.random.normal(k3, (C, Cr), dtype=jnp.float32) * 0.5   # fc2.weight
        b2 = jax.random.normal(k4, (C,), dtype=jnp.float32) * 0.1      # fc2.bias
        wc = jax.random.normal(k5, (1, C), dtype=jnp.float32) * 0.5    # conv1.weight
        bc = jax.random.normal(k6, (1,), dtype=jnp.float32) * 0.1      # conv1.bias

        ref = cbam_reference(x, w1, b1, w2, b2, wc, bc)

        # Fused single-pass path (auto-selected for these small slabs).
        out_fused = jax.block_until_ready(
            cbam_forward(x, w1, b1, w2, b2, wc, bc))
        np.testing.assert_allclose(np.asarray(out_fused), np.asarray(ref),
                                   rtol=1e-3, atol=1e-3)

        # Two-pass fallback path, forced with a small tile to exercise chunked
        # accumulation and the ragged-tail masking.
        out_2p = jax.block_until_ready(
            cbam_forward(x, w1, b1, w2, b2, wc, bc,
                         force_two_pass=True, spatial_tile=tile))
        np.testing.assert_allclose(np.asarray(out_2p), np.asarray(ref),
                                   rtol=1e-3, atol=1e-3)

    print("KERNEL_OK")
</pallas_src>

<mosaic_0001>
module attributes {stable_mosaic.version = 11 : i64} {
  func.func @_fused_kernel(%arg0: i32, %arg1: memref<1x4x256xf32, #tpu.memory_space<vmem>>, %arg2: memref<1x4xf32, #tpu.memory_space<vmem>>, %arg3: memref<1x1xf32, #tpu.memory_space<vmem>>, %arg4: memref<4x1xf32, #tpu.memory_space<vmem>>, %arg5: memref<4x1xf32, #tpu.memory_space<vmem>>, %arg6: memref<1x4xf32, #tpu.memory_space<vmem>>, %arg7: memref<1xf32, #tpu.memory_space<smem>>, %arg8: memref<1x4x256xf32, #tpu.memory_space<vmem>>) attributes {dimension_semantics = [#tpu.dimension_semantics<parallel>], iteration_bounds = array<i64: 2>, scalar_prefetch = 0 : i64, scratch_operands = 0 : i64, tpu.core_type = #tpu.core_type<tc>, window_params = [{transform_indices = @transform_0, window_bounds = array<i64: 1, 4, 256>}, {pipeline_mode = #tpu.pipeline_mode<synchronous>, transform_indices = @transform_1, window_bounds = array<i64: 1, 4>}, {pipeline_mode = #tpu.pipeline_mode<synchronous>, transform_indices = @transform_2, window_bounds = array<i64: 1, 1>}, {pipeline_mode = #tpu.pipeline_mode<synchronous>, transform_indices = @transform_3, window_bounds = array<i64: 4, 1>}, {pipeline_mode = #tpu.pipeline_mode<synchronous>, transform_indices = @transform_4, window_bounds = array<i64: 4, 1>}, {pipeline_mode = #tpu.pipeline_mode<synchronous>, transform_indices = @transform_5, window_bounds = array<i64: 1, 4>}, {transform_indices = @transform_6, window_bounds = array<i64: 1>}, {transform_indices = @transform_7, window_bounds = array<i64: 1, 4, 256>}]} {
    %c0 = arith.constant 0 : index
    %c0_0 = arith.constant 0 : index
    %c0_1 = arith.constant 0 : index
    %0 = vector.load %arg1[%c0, %c0_0, %c0_1] : memref<1x4x256xf32, #tpu.memory_space<vmem>>, vector<1x4x256xf32>
    %1 = vector.shape_cast %0 : vector<1x4x256xf32> to vector<4x256xf32>
    %cst = arith.constant dense<0.000000e+00> : vector<4xf32>
    %2 = vector.multi_reduction <add>, %1, %cst [1] : vector<4x256xf32> to vector<4xf32>
    %3 = vector.shape_cast %2 : vector<4xf32> to vector<4x1xf32>
    %cst_2 = arith.constant 3.906250e-03 : f32
    %4 = vector.broadcast %cst_2 : f32 to vector<4x1xf32>
    %5 = arith.mulf %3, %4 : vector<4x1xf32>
    %cst_3 = arith.constant dense<0xFF800000> : vector<4xf32>
    %6 = vector.multi_reduction <maximumf>, %1, %cst_3 [1] : vector<4x256xf32> to vector<4xf32>
    %7 = vector.shape_cast %6 : vector<4xf32> to vector<4x1xf32>
    %8 = tpu.concatenate %5, %7 in 1 : vector<4x1xf32>, vector<4x1xf32> -> vector<4x2xf32>
    %c0_4 = arith.constant 0 : index
    %c0_5 = arith.constant 0 : index
    %9 = vector.load %arg2[%c0_4, %c0_5] : memref<1x4xf32, #tpu.memory_space<vmem>>, vector<1x4xf32>
    %cst_6 = arith.constant dense<0.000000e+00> : vector<1x2xf32>
    %10 = tpu.matmul %9, %8, %cst_6 {dimension_numbers = #tpu.dot_dimension_numbers<[1], [0], [0], [1], [0, 0, 1, 1], [], []>, precision = #tpu.contract_precision<fp32>} : vector<1x4xf32>, vector<4x2xf32>, vector<1x2xf32> -> vector<1x2xf32>
    %c0_7 = arith.constant 0 : index
    %c0_8 = arith.constant 0 : index
    %11 = vector.load %arg3[%c0_7, %c0_8] : memref<1x1xf32, #tpu.memory_space<vmem>>, vector<1x1xf32>
    %12 = vector.broadcast %11 : vector<1x1xf32> to vector<1x2xf32>
    %13 = arith.addf %10, %12 : vector<1x2xf32>
    %cst_9 = arith.constant 0.000000e+00 : f32
    %14 = vector.broadcast %cst_9 : f32 to vector<1x2xf32>
    %15 = arith.maximumf %13, %14 : vector<1x2xf32>
    %c0_10 = arith.constant 0 : index
    %c0_11 = arith.constant 0 : index
    %16 = vector.load %arg4[%c0_10, %c0_11] : memref<4x1xf32, #tpu.memory_space<vmem>>, vector<4x1xf32>
    %cst_12 = arith.constant dense<0.000000e+00> : vector<4x2xf32>
    %17 = tpu.matmul %16, %15, %cst_12 {dimension_numbers = #tpu.dot_dimension_numbers<[1], [0], [0], [1], [0, 0, 1, 1], [], []>, precision = #tpu.contract_precision<fp32>} : vector<4x1xf32>, vector<1x2xf32>, vector<4x2xf32> -> vector<4x2xf32>
    %c0_13 = arith.constant 0 : index
    %c0_14 = arith.constant 0 : index
    %18 = vector.load %arg5[%c0_13, %c0_14] : memref<4x1xf32, #tpu.memory_space<vmem>>, vector<4x1xf32>
    %19 = vector.broadcast %18 : vector<4x1xf32> to vector<4x2xf32>
    %20 = arith.addf %17, %19 : vector<4x2xf32>
    %21 = vector.extract_strided_slice %20 {offsets = [0, 0], sizes = [4, 1], strides = [1, 1]} : vector<4x2xf32> to vector<4x1xf32>
    %22 = vector.extract_strided_slice %20 {offsets = [0, 1], sizes = [4, 1], strides = [1, 1]} : vector<4x2xf32> to vector<4x1xf32>
    %23 = arith.addf %21, %22 : vector<4x1xf32>
    %24 = arith.negf %23 : vector<4x1xf32>
    %25 = math.exp %24 : vector<4x1xf32>
    %cst_15 = arith.constant 1.000000e+00 : f32
    %26 = vector.broadcast %cst_15 : f32 to vector<4x1xf32>
    %27 = arith.addf %26, %25 : vector<4x1xf32>
    %28 = arith.divf %26, %27 : vector<4x1xf32>
    %c0_16 = arith.constant 0 : index
    %c0_17 = arith.constant 0 : index
    %29 = vector.load %arg6[%c0_16, %c0_17] : memref<1x4xf32, #tpu.memory_space<vmem>>, vector<1x4xf32>
    %cst_18 = arith.constant dense<0.000000e+00> : vector<1x256xf32>
    %30 = tpu.matmul %29, %1, %cst_18 {dimension_numbers = #tpu.dot_dimension_numbers<[1], [0], [0], [1], [0, 0, 1, 1], [], []>, precision = #tpu.contract_precision<fp32>} : vector<1x4xf32>, vector<4x256xf32>, vector<1x256xf32> -> vector<1x256xf32>
    %c0_19 = arith.constant 0 : index
    %31 = memref.load %arg7[%c0_19] : memref<1xf32, #tpu.memory_space<smem>>
    %32 = vector.broadcast %31 : f32 to vector<1x256xf32>
    %33 = arith.addf %30, %32 : vector<1x256xf32>
    %34 = arith.negf %33 : vector<1x256xf32>
    %35 = math.exp %34 : vector<1x256xf32>
    %cst_20 = arith.constant 1.000000e+00 : f32
    %36 = vector.broadcast %cst_20 : f32 to vector<1x256xf32>
    %37 = arith.addf %36, %35 : vector<1x256xf32>
    %38 = arith.divf %36, %37 : vector<1x256xf32>
    %39 = vector.broadcast %28 : vector<4x1xf32> to vector<4x256xf32>
    %40 = arith.mulf %1, %39 : vector<4x256xf32>
    %41 = vector.broadcast %38 : vector<1x256xf32> to vector<4x256xf32>
    %42 = arith.mulf %40, %41 : vector<4x256xf32>
    %c0_21 = arith.constant 0 : index
    %c0_22 = arith.constant 0 : index
    %c0_23 = arith.constant 0 : index
    %43 = vector.load %arg8[%c0_21, %c0_22, %c0_23] : memref<1x4x256xf32, #tpu.memory_space<vmem>>, vector<1x4x256xf32>
    %44 = vector.shape_cast %43 : vector<1x4x256xf32> to vector<4x256xf32>
    %45 = vector.shape_cast %42 : vector<4x256xf32> to vector<1x4x256xf32>
    tpu.vector_store %arg8[%c0_21, %c0_22, %c0_23], %45 {strides = array<i32>} : memref<1x4x256xf32, #tpu.memory_space<vmem>>, vector<1x4x256xf32>,
    return
  }
  func.func @transform_0(%arg0: i32) -> (i32, i32, i32) {
    %c0_i32 = arith.constant 0 : i32
    %c0_i32_0 = arith.constant 0 : i32
    %c0_i32_1 = arith.constant 0 : i32
    return %arg0, %c0_i32, %c0_i32_0 : i32, i32, i32
  }
  func.func @transform_1(%arg0: i32) -> (i32, i32) {
    %c0_i32 = arith.constant 0 : i32
    %c0_i32_0 = arith.constant 0 : i32
    %c0_i32_1 = arith.constant 0 : i32
    return %c0_i32, %c0_i32_0 : i32, i32
  }
  func.func @transform_2(%arg0: i32) -> (i32, i32) {
    %c0_i32 = arith.constant 0 : i32
    %c0_i32_0 = arith.constant 0 : i32
    %c0_i32_1 = arith.constant 0 : i32
    return %c0_i32, %c0_i32_0 : i32, i32
  }
  func.func @transform_3(%arg0: i32) -> (i32, i32) {
    %c0_i32 = arith.constant 0 : i32
    %c0_i32_0 = arith.constant 0 : i32
    %c0_i32_1 = arith.constant 0 : i32
    return %c0_i32, %c0_i32_0 : i32, i32
  }
  func.func @transform_4(%arg0: i32) -> (i32, i32) {
    %c0_i32 = arith.constant 0 : i32
    %c0_i32_0 = arith.constant 0 : i32
    %c0_i32_1 = arith.constant 0 : i32
    return %c0_i32, %c0_i32_0 : i32, i32
  }
  func.func @transform_5(%arg0: i32) -> (i32, i32) {
    %c0_i32 = arith.constant 0 : i32
    %c0_i32_0 = arith.constant 0 : i32
    %c0_i32_1 = arith.constant 0 : i32
    return %c0_i32, %c0_i32_0 : i32, i32
  }
  func.func @transform_6(%arg0: i32) -> i32 {
    %c0_i32 = arith.constant 0 : i32
    %c0_i32_0 = arith.constant 0 : i32
    return %c0_i32 : i32
  }
  func.func @transform_7(%arg0: i32) -> (i32, i32, i32) {
    %c0_i32 = arith.constant 0 : i32
    %c0_i32_0 = arith.constant 0 : i32
    %c0_i32_1 = arith.constant 0 : i32
    return %arg0, %c0_i32, %c0_i32_0 : i32, i32, i32
  }
}

</mosaic_0001>

<llo_original>
// kernel: cbam_forward.1
$region0: #{cbam_forward.1}
  #allocation0 [shape = 'u32[]', space=smem, size = 0x4, offset = 0x4, fixed_abs, tag = 'smem constant byte address 0x4 - core index']
  #allocation1 [shape = 'u32[144,128]{1,0:T(1,128)}', space=vmem, size = 0x12000, scoped, tag = 'internal scratch']
  #allocation2 [shape = 'f32[1,1]{1,0:T(1,128)S(1)}', space=vmem, size = 0x200, scoped, tag = 'scoped memory for cbam_forward.1']
  #allocation3 [shape = 'f32[1]{0:T(128)S(6)}', space=smem, size = 0x200, scoped, tag = 'scoped memory for cbam_forward.1']
  %s0 = inlined_call_operand.vmem [shape: f32[2,4,256], index: 0, kind: input, shape index: {}]
  %s1 = inlined_call_operand.vmem [shape: f32[1,4], index: 1, kind: input, shape index: {}]
  %s2 = inlined_call_operand.<no memory space> [shape: f32[1,1], index: 2, kind: input, shape index: {}]
  %s3 = inlined_call_operand.vmem [shape: f32[4,1], index: 3, kind: input, shape index: {}]
  %s4 = inlined_call_operand.vmem [shape: f32[4,1], index: 4, kind: input, shape index: {}]
  %s5 = inlined_call_operand.vmem [shape: f32[1,4], index: 5, kind: input, shape index: {}]
  %s6 = inlined_call_operand.<no memory space> [shape: f32[1], index: 6, kind: input, shape index: {}]
  %s7 = inlined_call_operand.vmem [shape: f32[2,4,256], index: 7, kind: output, shape index: {}]
  %s8 = sld [smem:[#allocation0]]
  $region61: #{cbam_forward.1} parent=0
    _
  %s10 = ssub.s32 1, %s8
  %s11 = scalar_select 0, %s10, %s8
  %v12 = vstv %s2
  %13 = vst [vmem:[#allocation2] sm:$0x1] %v12
  %14 = sst [smem:[#allocation3]] %s6
  loop: start=0, step=1, limit=4
  $region2: #{cbam_forward.1} parent=0 // loop_pre_header
    _
  $region3: #{cbam_forward.1} parent=0 // loop_header
    %s16 = sphi 0, %s20
    %p17 = scmp.ge.s32.totalorder %s16, 4
    %s26 = sphi 0, %s28
    %s29 = sphi 0, %s26
    %s30 = sphi 0, %s29
    %s46 = sphi 0, %s30
    %s50 = sphi 0, %s50
    %s52 = sphi 0, %s50
    %s53 = sphi 0, %s52
    %s67 = sphi 0, %s53
    %s71 = sphi 0, %s71
    %s73 = sphi 0, %s71
    %s74 = sphi 0, %s73
    %s88 = sphi 0, %s74
    %s92 = sphi 0, %s92
    %s94 = sphi 0, %s92
    %s95 = sphi 0, %s94
    %s109 = sphi 0, %s95
    %s113 = sphi 0, %s113
    %s115 = sphi 0, %s113
    %s116 = sphi 0, %s115
    %s130 = sphi 0, %s116
    %s134 = sphi 0, %s134
    %s136 = sphi 0, %s134
    %s137 = sphi 0, %s136
    %s151 = sphi 0, %s137
    %s155 = sphi 0, %s155
    %s157 = sphi 0, %s155
    %s158 = sphi 0, %s157
    %s172 = sphi 0, %s158
    %s178 = sphi 0, %s180
    %s181 = sphi 0, %s178
    %s182 = sphi 0, %s181
    %s198 = sphi 0, %s182
  $region4: #{cbam_forward.1} parent=0 // loop_header_branch
    %19 = sbr.rel (%p17) target = $region8
  $region5: #{cbam_forward.1} parent=0 // loop_body
    %s21 = ssub.s32 %s16, 1
    %s22 = ssub.s32 %s16, 2
    %s23 = sadd.s32 %s16, 1
    %s24 = ssub.s32 %s16, %s23
    %p25 = scmp.eq.s32.totalorder %s24, 0
    %s27 = sadd.s32 %s26, 1
    %s28 = scalar_select %p25, %s26, %s27
    %p31 = pneg %p25
    %p32 = scmp.eq.s32.totalorder %s16, 1
    %p33 = por %p31, %p32
    %p34 = scmp.ne.s32.totalorder %s26, %s29
    %p35 = scmp.eq.s32.totalorder %s16, 0
    %p36 = por %p34, %p35
    %p37 = scmp.ne.s32.totalorder %s26, %s29
    %p38 = scmp.eq.s32.totalorder %s21, 1
    %p39 = por %p37, %p38
    %p40 = scmp.ne.s32.totalorder %s29, %s30
    %p41 = scmp.eq.s32.totalorder %s21, 0
    %p42 = por %p40, %p41
    %p43 = scmp.ne.s32.totalorder %s29, %s30
    %p44 = scmp.eq.s32.totalorder %s22, 1
    %p45 = por %p43, %p44
    %p47 = scmp.ne.s32.totalorder %s30, %s46
    %p48 = scmp.eq.s32.totalorder %s22, 0
    %p49 = por %p47, %p48
    %s51 = sadd.s32 %s50, 1
    %p54 = scmp.eq.s32.totalorder %s16, 1
    %p55 = scmp.ne.s32.totalorder %s50, %s52
    %p56 = scmp.eq.s32.totalorder %s16, 0
    %p57 = por %p55, %p56
    %p58 = scmp.ne.s32.totalorder %s50, %s52
    %p59 = scmp.eq.s32.totalorder %s21, 1
    %p60 = por %p58, %p59
    %p61 = scmp.ne.s32.totalorder %s52, %s53
    %p62 = scmp.eq.s32.totalorder %s21, 0
    %p63 = por %p61, %p62
    %p64 = scmp.ne.s32.totalorder %s52, %s53
    %p65 = scmp.eq.s32.totalorder %s22, 1
    %p66 = por %p64, %p65
    %p68 = scmp.ne.s32.totalorder %s53, %s67
    %p69 = scmp.eq.s32.totalorder %s22, 0
    %p70 = por %p68, %p69
    %s72 = sadd.s32 %s71, 1
    %p75 = scmp.eq.s32.totalorder %s16, 1
    %p76 = scmp.ne.s32.totalorder %s71, %s73
    %p77 = scmp.eq.s32.totalorder %s16, 0
    %p78 = por %p76, %p77
    %p79 = scmp.ne.s32.totalorder %s71, %s73
    %p80 = scmp.eq.s32.totalorder %s21, 1
    %p81 = por %p79, %p80
    %p82 = scmp.ne.s32.totalorder %s73, %s74
    %p83 = scmp.eq.s32.totalorder %s21, 0
    %p84 = por %p82, %p83
    %p85 = scmp.ne.s32.totalorder %s73, %s74
    %p86 = scmp.eq.s32.totalorder %s22, 1
    %p87 = por %p85, %p86
    %p89 = scmp.ne.s32.totalorder %s74, %s88
    %p90 = scmp.eq.s32.totalorder %s22, 0
    %p91 = por %p89, %p90
    %s93 = sadd.s32 %s92, 1
    %p96 = scmp.eq.s32.totalorder %s16, 1
    %p97 = scmp.ne.s32.totalorder %s92, %s94
    %p98 = scmp.eq.s32.totalorder %s16, 0
    %p99 = por %p97, %p98
    %p100 = scmp.ne.s32.totalorder %s92, %s94
    %p101 = scmp.eq.s32.totalorder %s21, 1
    %p102 = por %p100, %p101
    %p103 = scmp.ne.s32.totalorder %s94, %s95
    %p104 = scmp.eq.s32.totalorder %s21, 0
    %p105 = por %p103, %p104
    %p106 = scmp.ne.s32.totalorder %s94, %s95
    %p107 = scmp.eq.s32.totalorder %s22, 1
    %p108 = por %p106, %p107
    %p110 = scmp.ne.s32.totalorder %s95, %s109
    %p111 = scmp.eq.s32.totalorder %s22, 0
    %p112 = por %p110, %p111
    %s114 = sadd.s32 %s113, 1
    %p117 = scmp.eq.s32.totalorder %s16, 1
    %p118 = scmp.ne.s32.totalorder %s113, %s115
    %p119 = scmp.eq.s32.totalorder %s16, 0
    %p120 = por %p118, %p119
    %p121 = scmp.ne.s32.totalorder %s113, %s115
    %p122 = scmp.eq.s32.totalorder %s21, 1
    %p123 = por %p121, %p122
    %p124 = scmp.ne.s32.totalorder %s115, %s116
    %p125 = scmp.eq.s32.totalorder %s21, 0
    %p126 = por %p124, %p125
    %p127 = scmp.ne.s32.totalorder %s115, %s116
    %p128 = scmp.eq.s32.totalorder %s22, 1
    %p129 = por %p127, %p128
    %p131 = scmp.ne.s32.totalorder %s116, %s130
    %p132 = scmp.eq.s32.totalorder %s22, 0
    %p133 = por %p131, %p132
    %s135 = sadd.s32 %s134, 1
    %p138 = scmp.eq.s32.totalorder %s16, 1
    %p139 = scmp.ne.s32.totalorder %s134, %s136
    %p140 = scmp.eq.s32.totalorder %s16, 0
    %p141 = por %p139, %p140
    %p142 = scmp.ne.s32.totalorder %s134, %s136
    %p143 = scmp.eq.s32.totalorder %s21, 1
    %p144 = por %p142, %p143
    %p145 = scmp.ne.s32.totalorder %s136, %s137
    %p146 = scmp.eq.s32.totalorder %s21, 0
    %p147 = por %p145, %p146
    %p148 = scmp.ne.s32.totalorder %s136, %s137
    %p149 = scmp.eq.s32.totalorder %s22, 1
    %p150 = por %p148, %p149
    %p152 = scmp.ne.s32.totalorder %s137, %s151
    %p153 = scmp.eq.s32.totalorder %s22, 0
    %p154 = por %p152, %p153
    %s156 = sadd.s32 %s155, 1
    %p159 = scmp.eq.s32.totalorder %s16, 1
    %p160 = scmp.ne.s32.totalorder %s155, %s157
    %p161 = scmp.eq.s32.totalorder %s16, 0
    %p162 = por %p160, %p161
    %p163 = scmp.ne.s32.totalorder %s155, %s157
    %p164 = scmp.eq.s32.totalorder %s21, 1
    %p165 = por %p163, %p164
    %p166 = scmp.ne.s32.totalorder %s157, %s158
    %p167 = scmp.eq.s32.totalorder %s21, 0
    %p168 = por %p166, %p167
    %p169 = scmp.ne.s32.totalorder %s157, %s158
    %p170 = scmp.eq.s32.totalorder %s22, 1
    %p171 = por %p169, %p170
    %p173 = scmp.ne.s32.totalorder %s158, %s172
    %p174 = scmp.eq.s32.totalorder %s22, 0
    %p175 = por %p173, %p174
    %s176 = ssub.s32 %s16, %s23
    %p177 = scmp.eq.s32.totalorder %s176, 0
    %s179 = sadd.s32 %s178, 1
    %s180 = scalar_select %p177, %s178, %s179
    %p183 = pneg %p177
    %p184 = scmp.eq.s32.totalorder %s16, 1
    %p185 = por %p183, %p184
    %p186 = scmp.ne.s32.totalorder %s178, %s181
    %p187 = scmp.eq.s32.totalorder %s16, 0
    %p188 = por %p186, %p187
    %p189 = scmp.ne.s32.totalorder %s178, %s181
    %p190 = scmp.eq.s32.totalorder %s21, 1
    %p191 = por %p189, %p190
    %p192 = scmp.ne.s32.totalorder %s181, %s182
    %p193 = scmp.eq.s32.totalorder %s21, 0
    %p194 = por %p192, %p193
    %p195 = scmp.ne.s32.totalorder %s181, %s182
    %p196 = scmp.eq.s32.totalorder %s22, 1
    %p197 = por %p195, %p196
    %p199 = scmp.ne.s32.totalorder %s182, %s198
    %p200 = scmp.eq.s32.totalorder %s22, 0
    %p201 = por %p199, %p200
    %p202 = scmp.le.s32.totalorder 1, %s16
    %p203 = scmp.lt.s32.totalorder %s16, 3
    %p204 = pnand %p202, %p203
    %p205 = pneg %p204
    // Predicated region
    $region9: #{cbam_forward.1} parent=5 // pred_check
      _
    $region10: #{cbam_forward.1} parent=5 // pred_check_branch
      %207 = sbr.rel (%p204) target = $region12
    $region11: #{cbam_forward.1} parent=5 // pred_region
      %s208 = ssub.s32 %s16, 1
      // Predicated region
      $region13: #{cbam_forward.1} parent=11 // pred_check
        %p209 = pneg %p63
      $region14: #{cbam_forward.1} parent=11 // pred_check_branch
        %211 = sbr.rel (%p209) target = $region16
      $region15: #{cbam_forward.1} parent=11 // pred_region
        _
      $region16: #{cbam_forward.1} parent=11 // pred_fallthru
        _
      // Predicated region
      $region17: #{cbam_forward.1} parent=11 // pred_check
        %p212 = pneg %p84
      $region18: #{cbam_forward.1} parent=11 // pred_check_branch
        %214 = sbr.rel (%p212) target = $region20
      $region19: #{cbam_forward.1} parent=11 // pred_region
        _
      $region20: #{cbam_forward.1} parent=11 // pred_fallthru
        _
      // Predicated region
      $region21: #{cbam_forward.1} parent=11 // pred_check
        %p215 = pneg %p105
      $region22: #{cbam_forward.1} parent=11 // pred_check_branch
        %217 = sbr.rel (%p215) target = $region24
      $region23: #{cbam_forward.1} parent=11 // pred_region
        _
      $region24: #{cbam_forward.1} parent=11 // pred_fallthru
        _
      // Predicated region
      $region25: #{cbam_forward.1} parent=11 // pred_check
        %p218 = pneg %p126
      $region26: #{cbam_forward.1} parent=11 // pred_check_branch
        %220 = sbr.rel (%p218) target = $region28
      $region27: #{cbam_forward.1} parent=11 // pred_region
        _
      $region28: #{cbam_forward.1} parent=11 // pred_fallthru
        _
      // Predicated region
      $region29: #{cbam_forward.1} parent=11 // pred_check
        %p221 = pneg %p147
      $region30: #{cbam_forward.1} parent=11 // pred_check_branch
        %223 = sbr.rel (%p221) target = $region32
      $region31: #{cbam_forward.1} parent=11 // pred_region
        _
      $region32: #{cbam_forward.1} parent=11 // pred_fallthru
        _
      // Predicated region
      $region33: #{cbam_forward.1} parent=11 // pred_check
        %p224 = pneg %p168
      $region34: #{cbam_forward.1} parent=11 // pred_check_branch
        %226 = sbr.rel (%p224) target = $region36
      $region35: #{cbam_forward.1} parent=11 // pred_region
        _
      $region36: #{cbam_forward.1} parent=11 // pred_fallthru
        _
    $region12: #{cbam_forward.1} parent=5 // pred_fallthru
      _
    %p227 = scmp.lt.s32.totalorder %s16, 2
    // Predicated region
    $region37: #{cbam_forward.1} parent=5 // pred_check
      %p228 = pneg %p227
    $region38: #{cbam_forward.1} parent=5 // pred_check_branch
      %230 = sbr.rel (%p228) target = $region40
    $region39: #{cbam_forward.1} parent=5 // pred_region
      // Predicated region
      $region41: #{cbam_forward.1} parent=39 // pred_check
        %p231 = pneg %p36
      $region42: #{cbam_forward.1} parent=39 // pred_check_branch
        %233 = sbr.rel (%p231) target = $region44
      $region43: #{cbam_forward.1} parent=39 // pred_region
        %p234 = scmp.lt.s32.totalorder %s16, 1
        %s235 = scalar_select %p234, %s16, 1
        %s236 = smul.addr %s235, 2
        %s237 = smul.addr %s236, 4
        %s238 = scalar_lea.vmem %s0, %s237
      $region44: #{cbam_forward.1} parent=39 // pred_fallthru
        _
    $region40: #{cbam_forward.1} parent=5 // pred_fallthru
      _
    %p239 = scmp.le.s32.totalorder 1, %s16
    %p240 = scmp.lt.s32.totalorder %s16, 3
    %p241 = pnand %p239, %p240
    %p242 = pneg %p241
    // Predicated region
    $region45: #{cbam_forward.1} parent=5 // pred_check
      _
    $region46: #{cbam_forward.1} parent=5 // pred_check_branch
      %244 = sbr.rel (%p241) target = $region48
    $region47: #{cbam_forward.1} parent=5 // pred_region
      %s245 = ssub.s32 %s16, 1
      %p246 = scmp.lt.s32.totalorder %s21, 1
      %s247 = scalar_select %p246, %s21, 1
      %s248 = smul.addr %s247, 2
      %s249 = smul.addr %s248, 4
      %s250 = scalar_lea.vmem %s0, %s249
      %p251 = pneg %p42
      %p252 = pneg %p39
      %p253 = pneg %p63
      %p254 = pneg %p60
      %p255 = pneg %p84
      %p256 = pneg %p81
      %p257 = pneg %p105
      %p258 = pneg %p102
      %p259 = pneg %p126
      %p260 = pneg %p123
      %p261 = pneg %p147
      %p262 = pneg %p144
      %p263 = pneg %p168
      %p264 = pneg %p165
      %p265 = pneg %p194
      %p266 = pneg %p191
      %p267 = scmp.lt.s32.totalorder %s21, 1
      %s268 = scalar_select %p267, %s21, 1
      %s269 = smul.addr %s268, 2
      %s270 = smul.addr %s269, 4
      %s271 = scalar_lea.vmem %s7, %s270
      %p272 = scmp.lt.s32.totalorder %s21, 1
      %s273 = scalar_select %p272, %s21, 1
      %s274 = smul.addr %s273, 2
      %s275 = smul.addr %s274, 4
      %s276 = scalar_lea.vmem %s0, %s275
      %p277 = scmp.lt.s32.totalorder %s21, 1
      %s278 = scalar_select %p277, %s21, 1
      %s279 = smul.addr %s278, 2
      %s280 = smul.addr %s279, 4
      %s281 = scalar_lea.vmem %s7, %s280
      %v282 = vld [vmem:[%s276] sm:$0xff]
      %v284 = vcombine.high %v282, %v282
      %vm286 = vcmask 1043456
      %v287 = vsel %vm286, %v282, 0.0
      %v288 = vsel %vm286, %v284, 0.0
      %v289 = vadd.f32 %v287, %v288
      %290 = vadd.xlane.f32.xlu0 %v289
      %v291 = vpop.xlane.xlu0 %290
      %v292 = vmul.f32 %v291, 0.00390625
      %v293 = vsel %vm286, %v282, -inf
      %v294 = vsel %vm286, %v284, -inf
      %v295 = vmax.f32 %v293, %v294
      %296 = vmax.xlane.f32.xlu0 %v295
      %v297 = vpop.xlane.xlu0 %296
      %vm298 = vcmask 7168
      %v299 = vsel %vm298, %v292, %v297
      %v300 = vld [vmem:[%s1] sm:$0x1]
      %v301 = vld [vmem:[#allocation2] sm:$0x1]
      %303 = vset.pattern.permute.xlu0 0
      %304 = vperm.xlu0 %303, %v301
      %v305 = vpop.permute.xlu0 %304
      %v307 = vlaneseq
      %v308 = vshrl.u32 %v307, 7
      %v309 = vsub.s32 0, %v308
      %v310 = vrot.slane %v305, %v309
      %vm311 = vcmask 31744
      %v313 = vsel %vm311, %v300, 0
      %v316 = vsel %vm286, %v299, 0
      %318 = vmatprep.subr.mxu0 0.0
      %v319 = vand.u32 %v316, 4294901760
      %320 = vmatpush1.msra.mxu0 %v319
      %321 = vmatprep.subr.mxu0 0.0
      %322 = vmatpush1.msra.mxu0 0.0
      %323 = vmatprep.subr.mxu0 0.0
      %324 = vmatpush1.msra.mxu0 0.0
      %325 = vmatprep.subr.mxu0 0.0
      %326 = vmatpush1.msra.mxu0 0.0
      %327 = vmatprep.subr.mxu0 0.0
      %328 = vmatpush1.msra.mxu0 0.0
      %329 = vmatprep.subr.mxu0 0.0
      %330 = vmatpush1.msra.mxu0 0.0
      %331 = vmatprep.subr.mxu0 0.0
      %332 = vmatpush1.msra.mxu0 0.0
      %333 = vmatprep.subr.mxu0 0.0
      %334 = vmatpush1.msra.mxu0 0.0
      %335 = vmatprep.subr.mxu0 0.0
      %336 = vmatpush1.msra.mxu0 0.0
      %337 = vmatprep.subr.mxu0 0.0
      %338 = vmatpush1.msra.mxu0 0.0
      %339 = vmatprep.subr.mxu0 0.0
      %340 = vmatpush1.msra.mxu0 0.0
      %341 = vmatprep.subr.mxu0 0.0
      %342 = vmatpush1.msra.mxu0 0.0
      %343 = vmatprep.subr.mxu0 0.0
      %344 = vmatpush1.msra.mxu0 0.0
      %345 = vmatprep.subr.mxu0 0.0
      %346 = vmatpush1.msra.mxu0 0.0
      %347 = vmatprep.subr.mxu0 0.0
      %348 = vmatpush1.msra.mxu0 0.0
      %349 = vmatprep.subr.mxu0 0.0
      %350 = vmatpush1.msra.mxu0 0.0
      %351 = vmatprep.subr.mxu0 0.0
      %352 = vmatpush1.msra.mxu0 0.0
      %353 = vmatprep.subr.mxu0 0.0
      %354 = vmatpush1.msra.mxu0 0.0
      %355 = vmatprep.subr.mxu0 0.0
      %356 = vmatpush1.msra.mxu0 0.0
      %357 = vmatprep.subr.mxu0 0.0
      %358 = vmatpush1.msra.mxu0 0.0
      %359 = vmatprep.subr.mxu0 0.0
      %360 = vmatpush1.msra.mxu0 0.0
      %361 = vmatprep.subr.mxu0 0.0
      %362 = vmatpush1.msra.mxu0 0.0
      %363 = vmatprep.subr.mxu0 0.0
      %364 = vmatpush1.msra.mxu0 0.0
      %365 = vmatprep.subr.mxu0 0.0
      %366 = vmatpush1.msra.mxu0 0.0
      %367 = vmatprep.subr.mxu0 0.0
      %368 = vmatpush1.msra.mxu0 0.0
      %369 = vmatprep.subr.mxu0 0.0
      %370 = vmatpush1.msra.mxu0 0.0
      %371 = vmatprep.subr.mxu0 0.0
      %372 = vmatpush1.msra.mxu0 0.0
      %373 = vmatprep.subr.mxu0 0.0
      %374 = vmatpush1.msra.mxu0 0.0
      %375 = vmatprep.subr.mxu0 0.0
      %376 = vmatpush1.msra.mxu0 0.0
      %377 = vmatprep.subr.mxu0 0.0
      %378 = vmatpush1.msra.mxu0 0.0
      %379 = vmatprep.subr.mxu0 0.0
      %380 = vmatpush1.msra.mxu0 0.0
      %381 = vmatprep.subr.mxu0 0.0
      %382 = vmatpush1.msra.mxu0 0.0
      %383 = vmatprep.mubr.f32.mxu0 0.0
      %v384 = vand.u32 %v313, 4294901760
      %v385 = vsub.f32 %v313, %v384
      %v386 = vand.u32 %v385, 4294901760
      %v387 = vsub.f32 %v385, %v386
      %v388 = vand.u32 %v387, 4294901760
      %389 = vmatmul.mubr.f32.gmra.mrb[0].mxu0 %v388
      %v390 = vpop.f32.mrb[0].mxu0
      %v391 = vadd.f32 %v310, %v390
      %v392 = vpop.f32.mrb[0].mxu0
      %393 = vdwg.mxu0
      %394 = vmatprep.subr.mxu0 0.0
      %v395 = vand.u32 %v316, 4294901760
      %v396 = vsub.f32 %v316, %v395
      %v397 = vand.u32 %v396, 4294901760
      %v398 = vsub.f32 %v396, %v397
      %v399 = vand.u32 %v398, 4294901760
      %400 = vmatpush1.msra.mxu0 %v399
      %401 = vmatprep.subr.mxu0 0.0
      %402 = vmatpush1.msra.mxu0 0.0
      %403 = vmatprep.subr.mxu0 0.0
      %404 = vmatpush1.msra.mxu0 0.0
      %405 = vmatprep.subr.mxu0 0.0
      %406 = vmatpush1.msra.mxu0 0.0
      %407 = vmatprep.subr.mxu0 0.0
      %408 = vmatpush1.msra.mxu0 0.0
      %409 = vmatprep.subr.mxu0 0.0
      %410 = vmatpush1.msra.mxu0 0.0
      %411 = vmatprep.subr.mxu0 0.0
      %412 = vmatpush1.msra.mxu0 0.0
      %413 = vmatprep.subr.mxu0 0.0
      %414 = vmatpush1.msra.mxu0 0.0
      %415 = vmatprep.subr.mxu0 0.0
      %416 = vmatpush1.msra.mxu0 0.0
      %417 = vmatprep.subr.mxu0 0.0
      %418 = vmatpush1.msra.mxu0 0.0
      %419 = vmatprep.subr.mxu0 0.0
      %420 = vmatpush1.msra.mxu0 0.0
      %421 = vmatprep.subr.mxu0 0.0
      %422 = vmatpush1.msra.mxu0 0.0
      %423 = vmatprep.subr.mxu0 0.0
      %424 = vmatpush1.msra.mxu0 0.0
      %425 = vmatprep.subr.mxu0 0.0
      %426 = vmatpush1.msra.mxu0 0.0
      %427 = vmatprep.subr.mxu0 0.0
      %428 = vmatpush1.msra.mxu0 0.0
      %429 = vmatprep.subr.mxu0 0.0
      %430 = vmatpush1.msra.mxu0 0.0
      %431 = vmatprep.subr.mxu0 0.0
      %432 = vmatpush1.msra.mxu0 0.0
      %433 = vmatprep.subr.mxu0 0.0
      %434 = vmatpush1.msra.mxu0 0.0
      %435 = vmatprep.subr.mxu0 0.0
      %436 = vmatpush1.msra.mxu0 0.0
      %437 = vmatprep.subr.mxu0 0.0
      %438 = vmatpush1.msra.mxu0 0.0
      %439 = vmatprep.subr.mxu0 0.0
      %440 = vmatpush1.msra.mxu0 0.0
      %441 = vmatprep.subr.mxu0 0.0
      %442 = vmatpush1.msra.mxu0 0.0
      %443 = vmatprep.subr.mxu0 0.0
      %444 = vmatpush1.msra.mxu0 0.0
      %445 = vmatprep.subr.mxu0 0.0
      %446 = vmatpush1.msra.mxu0 0.0
      %447 = vmatprep.subr.mxu0 0.0
      %448 = vmatpush1.msra.mxu0 0.0
      %449 = vmatprep.subr.mxu0 0.0
      %450 = vmatpush1.msra.mxu0 0.0
      %451 = vmatprep.subr.mxu0 0.0
      %452 = vmatpush1.msra.mxu0 0.0
      %453 = vmatprep.subr.mxu0 0.0
      %454 = vmatpush1.msra.mxu0 0.0
      %455 = vmatprep.subr.mxu0 0.0
      %456 = vmatpush1.msra.mxu0 0.0
      %457 = vmatprep.subr.mxu0 0.0
      %458 = vmatpush1.msra.mxu0 0.0
      %459 = vmatprep.subr.mxu0 0.0
      %460 = vmatpush1.msra.mxu0 0.0
      %461 = vmatprep.subr.mxu0 0.0
      %462 = vmatpush1.msra.mxu0 0.0
      %463 = vmatprep.mubr.f32.mxu0 0.0
      %v464 = vand.u32 %v313, 4294901760
      %465 = vmatmul.mubr.f32.gmra.mrb[0].mxu0 %v464
      %v466 = vpop.f32.mrb[0].mxu0
      %v467 = vadd.f32 %v391, %v466
      %v468 = vpop.f32.mrb[0].mxu0
      %469 = vdwg.mxu0
      %470 = vmatprep.subr.mxu0 0.0
      %v471 = vand.u32 %v316, 4294901760
      %v472 = vsub.f32 %v316, %v471
      %473 = vmatpush1.msra.mxu0 %v472
      %474 = vmatprep.subr.mxu0 0.0
      %475 = vmatpush1.msra.mxu0 0.0
      %476 = vmatprep.subr.mxu0 0.0
      %477 = vmatpush1.msra.mxu0 0.0
      %478 = vmatprep.subr.mxu0 0.0
      %479 = vmatpush1.msra.mxu0 0.0
      %480 = vmatprep.subr.mxu0 0.0
      %481 = vmatpush1.msra.mxu0 0.0
      %482 = vmatprep.subr.mxu0 0.0
      %483 = vmatpush1.msra.mxu0 0.0
      %484 = vmatprep.subr.mxu0 0.0
      %485 = vmatpush1.msra.mxu0 0.0
      %486 = vmatprep.subr.mxu0 0.0
      %487 = vmatpush1.msra.mxu0 0.0
      %488 = vmatprep.subr.mxu0 0.0
      %489 = vmatpush1.msra.mxu0 0.0
      %490 = vmatprep.subr.mxu0 0.0
      %491 = vmatpush1.msra.mxu0 0.0
      %492 = vmatprep.subr.mxu0 0.0
      %493 = vmatpush1.msra.mxu0 0.0
      %494 = vmatprep.subr.mxu0 0.0
      %495 = vmatpush1.msra.mxu0 0.0
      %496 = vmatprep.subr.mxu0 0.0
      %497 = vmatpush1.msra.mxu0 0.0
      %498 = vmatprep.subr.mxu0 0.0
      %499 = vmatpush1.msra.mxu0 0.0
      %500 = vmatprep.subr.mxu0 0.0
      %501 = vmatpush1.msra.mxu0 0.0
      %502 = vmatprep.subr.mxu0 0.0
      %503 = vmatpush1.msra.mxu0 0.0
      %504 = vmatprep.subr.mxu0 0.0
      %505 = vmatpush1.msra.mxu0 0.0
      %506 = vmatprep.subr.mxu0 0.0
      %507 = vmatpush1.msra.mxu0 0.0
      %508 = vmatprep.subr.mxu0 0.0
      %509 = vmatpush1.msra.mxu0 0.0
      %510 = vmatprep.subr.mxu0 0.0
      %511 = vmatpush1.msra.mxu0 0.0
      %512 = vmatprep.subr.mxu0 0.0
      %513 = vmatpush1.msra.mxu0 0.0
      %514 = vmatprep.subr.mxu0 0.0
      %515 = vmatpush1.msra.mxu0 0.0
      %516 = vmatprep.subr.mxu0 0.0
      %517 = vmatpush1.msra.mxu0 0.0
      %518 = vmatprep.subr.mxu0 0.0
      %519 = vmatpush1.msra.mxu0 0.0
      %520 = vmatprep.subr.mxu0 0.0
      %521 = vmatpush1.msra.mxu0 0.0
      %522 = vmatprep.subr.mxu0 0.0
      %523 = vmatpush1.msra.mxu0 0.0
      %524 = vmatprep.subr.mxu0 0.0
      %525 = vmatpush1.msra.mxu0 0.0
      %526 = vmatprep.subr.mxu0 0.0
      %527 = vmatpush1.msra.mxu0 0.0
      %528 = vmatprep.subr.mxu0 0.0
      %529 = vmatpush1.msra.mxu0 0.0
      %530 = vmatprep.subr.mxu0 0.0
      %531 = vmatpush1.msra.mxu0 0.0
      %532 = vmatprep.subr.mxu0 0.0
      %533 = vmatpush1.msra.mxu0 0.0
      %534 = vmatprep.subr.mxu0 0.0
      %535 = vmatpush1.msra.mxu0 0.0
      %536 = vmatprep.mubr.f32.mxu0 0.0
      %v537 = vand.u32 %v313, 4294901760
      %v538 = vsub.f32 %v313, %v537
      %539 = vmatmul.mubr.f32.gmra.mrb[0].mxu0 %v538
      %v540 = vpop.f32.mrb[0].mxu0
      %v541 = vadd.f32 %v467, %v540
      %v542 = vpop.f32.mrb[0].mxu0
      %543 = vdwg.mxu0
      %544 = vmatprep.subr.mxu0 0.0
      %v545 = vand.u32 %v316, 4294901760
      %546 = vmatpush1.msra.mxu0 %v545
      %547 = vmatprep.subr.mxu0 0.0
      %548 = vmatpush1.msra.mxu0 0.0
      %549 = vmatprep.subr.mxu0 0.0
      %550 = vmatpush1.msra.mxu0 0.0
      %551 = vmatprep.subr.mxu0 0.0
      %552 = vmatpush1.msra.mxu0 0.0
      %553 = vmatprep.subr.mxu0 0.0
      %554 = vmatpush1.msra.mxu0 0.0
      %555 = vmatprep.subr.mxu0 0.0
      %556 = vmatpush1.msra.mxu0 0.0
      %557 = vmatprep.subr.mxu0 0.0
      %558 = vmatpush1.msra.mxu0 0.0
      %559 = vmatprep.subr.mxu0 0.0
      %560 = vmatpush1.msra.mxu0 0.0
      %561 = vmatprep.subr.mxu0 0.0
      %562 = vmatpush1.msra.mxu0 0.0
      %563 = vmatprep.subr.mxu0 0.0
      %564 = vmatpush1.msra.mxu0 0.0
      %565 = vmatprep.subr.mxu0 0.0
      %566 = vmatpush1.msra.mxu0 0.0
      %567 = vmatprep.subr.mxu0 0.0
      %568 = vmatpush1.msra.mxu0 0.0
      %569 = vmatprep.subr.mxu0 0.0
      %570 = vmatpush1.msra.mxu0 0.0
      %571 = vmatprep.subr.mxu0 0.0
      %572 = vmatpush1.msra.mxu0 0.0
      %573 = vmatprep.subr.mxu0 0.0
      %574 = vmatpush1.msra.mxu0 0.0
      %575 = vmatprep.subr.mxu0 0.0
      %576 = vmatpush1.msra.mxu0 0.0
      %577 = vmatprep.subr.mxu0 0.0
      %578 = vmatpush1.msra.mxu0 0.0
      %579 = vmatprep.subr.mxu0 0.0
      %580 = vmatpush1.msra.mxu0 0.0
      %581 = vmatprep.subr.mxu0 0.0
      %582 = vmatpush1.msra.mxu0 0.0
      %583 = vmatprep.subr.mxu0 0.0
      %584 = vmatpush1.msra.mxu0 0.0
      %585 = vmatprep.subr.mxu0 0.0
      %586 = vmatpush1.msra.mxu0 0.0
      %587 = vmatprep.subr.mxu0 0.0
      %588 = vmatpush1.msra.mxu0 0.0
      %589 = vmatprep.subr.mxu0 0.0
      %590 = vmatpush1.msra.mxu0 0.0
      %591 = vmatprep.subr.mxu0 0.0
      %592 = vmatpush1.msra.mxu0 0.0
      %593 = vmatprep.subr.mxu0 0.0
      %594 = vmatpush1.msra.mxu0 0.0
      %595 = vmatprep.subr.mxu0 0.0
      %596 = vmatpush1.msra.mxu0 0.0
      %597 = vmatprep.subr.mxu0 0.0
      %598 = vmatpush1.msra.mxu0 0.0
      %599 = vmatprep.subr.mxu0 0.0
      %600 = vmatpush1.msra.mxu0 0.0
      %601 = vmatprep.subr.mxu0 0.0
      %602 = vmatpush1.msra.mxu0 0.0
      %603 = vmatprep.subr.mxu0 0.0
      %604 = vmatpush1.msra.mxu0 0.0
      %605 = vmatprep.subr.mxu0 0.0
      %606 = vmatpush1.msra.mxu0 0.0
      %607 = vmatprep.subr.mxu0 0.0
      %608 = vmatpush1.msra.mxu0 0.0
      %609 = vmatprep.mubr.f32.mxu0 0.0
      %v610 = vand.u32 %v313, 4294901760
      %v611 = vsub.f32 %v313, %v610
      %v612 = vand.u32 %v611, 4294901760
      %613 = vmatmul.mubr.f32.gmra.mrb[0].mxu0 %v612
      %v614 = vpop.f32.mrb[0].mxu0
      %v615 = vadd.f32 %v541, %v614
      %v616 = vpop.f32.mrb[0].mxu0
      %617 = vdwg.mxu0
      %618 = vmatprep.subr.mxu0 0.0
      %v619 = vand.u32 %v316, 4294901760
      %v620 = vsub.f32 %v316, %v619
      %v621 = vand.u32 %v620, 4294901760
      %622 = vmatpush1.msra.mxu0 %v621
      %623 = vmatprep.subr.mxu0 0.0
      %624 = vmatpush1.msra.mxu0 0.0
      %625 = vmatprep.subr.mxu0 0.0
      %626 = vmatpush1.msra.mxu0 0.0
      %627 = vmatprep.subr.mxu0 0.0
      %628 = vmatpush1.msra.mxu0 0.0
      %629 = vmatprep.subr.mxu0 0.0
      %630 = vmatpush1.msra.mxu0 0.0
      %631 = vmatprep.subr.mxu0 0.0
      %632 = vmatpush1.msra.mxu0 0.0
      %633 = vmatprep.subr.mxu0 0.0
      %634 = vmatpush1.msra.mxu0 0.0
      %635 = vmatprep.subr.mxu0 0.0
      %636 = vmatpush1.msra.mxu0 0.0
      %637 = vmatprep.subr.mxu0 0.0
      %638 = vmatpush1.msra.mxu0 0.0
      %639 = vmatprep.subr.mxu0 0.0
      %640 = vmatpush1.msra.mxu0 0.0
      %641 = vmatprep.subr.mxu0 0.0
      %642 = vmatpush1.msra.mxu0 0.0
      %643 = vmatprep.subr.mxu0 0.0
      %644 = vmatpush1.msra.mxu0 0.0
      %645 = vmatprep.subr.mxu0 0.0
      %646 = vmatpush1.msra.mxu0 0.0
      %647 = vmatprep.subr.mxu0 0.0
      %648 = vmatpush1.msra.mxu0 0.0
      %649 = vmatprep.subr.mxu0 0.0
      %650 = vmatpush1.msra.mxu0 0.0
      %651 = vmatprep.subr.mxu0 0.0
      %652 = vmatpush1.msra.mxu0 0.0
      %653 = vmatprep.subr.mxu0 0.0
      %654 = vmatpush1.msra.mxu0 0.0
      %655 = vmatprep.subr.mxu0 0.0
      %656 = vmatpush1.msra.mxu0 0.0
      %657 = vmatprep.subr.mxu0 0.0
      %658 = vmatpush1.msra.mxu0 0.0
      %659 = vmatprep.subr.mxu0 0.0
      %660 = vmatpush1.msra.mxu0 0.0
      %661 = vmatprep.subr.mxu0 0.0
      %662 = vmatpush1.msra.mxu0 0.0
      %663 = vmatprep.subr.mxu0 0.0
      %664 = vmatpush1.msra.mxu0 0.0
      %665 = vmatprep.subr.mxu0 0.0
      %666 = vmatpush1.msra.mxu0 0.0
      %667 = vmatprep.subr.mxu0 0.0
      %668 = vmatpush1.msra.mxu0 0.0
      %669 = vmatprep.subr.mxu0 0.0
      %670 = vmatpush1.msra.mxu0 0.0
      %671 = vmatprep.subr.mxu0 0.0
      %672 = vmatpush1.msra.mxu0 0.0
      %673 = vmatprep.subr.mxu0 0.0
      %674 = vmatpush1.msra.mxu0 0.0
      %675 = vmatprep.subr.mxu0 0.0
      %676 = vmatpush1.msra.mxu0 0.0
      %677 = vmatprep.subr.mxu0 0.0
      %678 = vmatpush1.msra.mxu0 0.0
      %679 = vmatprep.subr.mxu0 0.0
      %680 = vmatpush1.msra.mxu0 0.0
      %681 = vmatprep.subr.mxu0 0.0
      %682 = vmatpush1.msra.mxu0 0.0
      %683 = vmatprep.subr.mxu0 0.0
      %684 = vmatpush1.msra.mxu0 0.0
      %685 = vmatprep.mubr.f32.mxu0 0.0
      %v686 = vand.u32 %v313, 4294901760
      %687 = vmatmul.mubr.f32.gmra.mrb[0].mxu0 %v686
      %v688 = vpop.f32.mrb[0].mxu0
      %v689 = vadd.f32 %v615, %v688
      %v690 = vpop.f32.mrb[0].mxu0
      %691 = vdwg.mxu0
      %692 = vmatprep.subr.mxu0 0.0
      %v693 = vand.u32 %v316, 4294901760
      %694 = vmatpush1.msra.mxu0 %v693
      %695 = vmatprep.subr.mxu0 0.0
      %696 = vmatpush1.msra.mxu0 0.0
      %697 = vmatprep.subr.mxu0 0.0
      %698 = vmatpush1.msra.mxu0 0.0
      %699 = vmatprep.subr.mxu0 0.0
      %700 = vmatpush1.msra.mxu0 0.0
      %701 = vmatprep.subr.mxu0 0.0
      %702 = vmatpush1.msra.mxu0 0.0
      %703 = vmatprep.subr.mxu0 0.0
      %704 = vmatpush1.msra.mxu0 0.0
      %705 = vmatprep.subr.mxu0 0.0
      %706 = vmatpush1.msra.mxu0 0.0
      %707 = vmatprep.subr.mxu0 0.0
      %708 = vmatpush1.msra.mxu0 0.0
      %709 = vmatprep.subr.mxu0 0.0
      %710 = vmatpush1.msra.mxu0 0.0
      %711 = vmatprep.subr.mxu0 0.0
      %712 = vmatpush1.msra.mxu0 0.0
      %713 = vmatprep.subr.mxu0 0.0
      %714 = vmatpush1.msra.mxu0 0.0
      %715 = vmatprep.subr.mxu0 0.0
      %716 = vmatpush1.msra.mxu0 0.0
      %717 = vmatprep.subr.mxu0 0.0
      %718 = vmatpush1.msra.mxu0 0.0
      %719 = vmatprep.subr.mxu0 0.0
      %720 = vmatpush1.msra.mxu0 0.0
      %721 = vmatprep.subr.mxu0 0.0
      %722 = vmatpush1.msra.mxu0 0.0
      %723 = vmatprep.subr.mxu0 0.0
      %724 = vmatpush1.msra.mxu0 0.0
      %725 = vmatprep.subr.mxu0 0.0
      %726 = vmatpush1.msra.mxu0 0.0
      %727 = vmatprep.subr.mxu0 0.0
      %728 = vmatpush1.msra.mxu0 0.0
      %729 = vmatprep.subr.mxu0 0.0
      %730 = vmatpush1.msra.mxu0 0.0
      %731 = vmatprep.subr.mxu0 0.0
      %732 = vmatpush1.msra.mxu0 0.0
      %733 = vmatprep.subr.mxu0 0.0
      %734 = vmatpush1.msra.mxu0 0.0
      %735 = vmatprep.subr.mxu0 0.0
      %736 = vmatpush1.msra.mxu0 0.0
      %737 = vmatprep.subr.mxu0 0.0
      %738 = vmatpush1.msra.mxu0 0.0
      %739 = vmatprep.subr.mxu0 0.0
      %740 = vmatpush1.msra.mxu0 0.0
      %741 = vmatprep.subr.mxu0 0.0
      %742 = vmatpush1.msra.mxu0 0.0
      %743 = vmatprep.subr.mxu0 0.0
      %744 = vmatpush1.msra.mxu0 0.0
      %745 = vmatprep.subr.mxu0 0.0
      %746 = vmatpush1.msra.mxu0 0.0
      %747 = vmatprep.subr.mxu0 0.0
      %748 = vmatpush1.msra.mxu0 0.0
      %749 = vmatprep.subr.mxu0 0.0
      %750 = vmatpush1.msra.mxu0 0.0
      %751 = vmatprep.subr.mxu0 0.0
      %752 = vmatpush1.msra.mxu0 0.0
      %753 = vmatprep.subr.mxu0 0.0
      %754 = vmatpush1.msra.mxu0 0.0
      %755 = vmatprep.subr.mxu0 0.0
      %756 = vmatpush1.msra.mxu0 0.0
      %757 = vmatprep.mubr.f32.mxu0 0.0
      %v758 = vand.u32 %v313, 4294901760
      %759 = vmatmul.mubr.f32.gmra.mrb[0].mxu0 %v758
      %v760 = vpop.f32.mrb[0].mxu0
      %v761 = vadd.f32 %v689, %v760
      %v762 = vpop.f32.mrb[0].mxu0
      %763 = vdwg.mxu0
      %v764 = vmax.f32 %v761, 0.0
      %v765 = vld [vmem:[%s3] sm:$0xf]
      %v766 = vld [vmem:[%s4] sm:$0xf]
      %768 = vset.pattern.permute.xlu0 0
      %769 = vperm.xlu0 %768, %v766
      %v770 = vpop.permute.xlu0 %769
      %v773 = vsel %vm298, %v765, 0
      %vm775 = vcmask 1040384
      %v777 = vsel %vm775, %v764, 0
      %779 = vmatprep.subr.mxu0 0.0
      %v780 = vand.u32 %v777, 4294901760
      %781 = vmatpush1.msra.mxu0 %v780
      %782 = vmatprep.subr.mxu0 0.0
      %783 = vmatpush1.msra.mxu0 0.0
      %784 = vmatprep.subr.mxu0 0.0
      %785 = vmatpush1.msra.mxu0 0.0
      %786 = vmatprep.subr.mxu0 0.0
      %787 = vmatpush1.msra.mxu0 0.0
      %788 = vmatprep.subr.mxu0 0.0
      %789 = vmatpush1.msra.mxu0 0.0
      %790 = vmatprep.subr.mxu0 0.0
      %791 = vmatpush1.msra.mxu0 0.0
      %792 = vmatprep.subr.mxu0 0.0
      %793 = vmatpush1.msra.mxu0 0.0
      %794 = vmatprep.subr.mxu0 0.0
      %795 = vmatpush1.msra.mxu0 0.0
      %796 = vmatprep.subr.mxu0 0.0
      %797 = vmatpush1.msra.mxu0 0.0
      %798 = vmatprep.subr.mxu0 0.0
      %799 = vmatpush1.msra.mxu0 0.0
      %800 = vmatprep.subr.mxu0 0.0
      %801 = vmatpush1.msra.mxu0 0.0
      %802 = vmatprep.subr.mxu0 0.0
      %803 = vmatpush1.msra.mxu0 0.0
      %804 = vmatprep.subr.mxu0 0.0
      %805 = vmatpush1.msra.mxu0 0.0
      %806 = vmatprep.subr.mxu0 0.0
      %807 = vmatpush1.msra.mxu0 0.0
      %808 = vmatprep.subr.mxu0 0.0
      %809 = vmatpush1.msra.mxu0 0.0
      %810 = vmatprep.subr.mxu0 0.0
      %811 = vmatpush1.msra.mxu0 0.0
      %812 = vmatprep.subr.mxu0 0.0
      %813 = vmatpush1.msra.mxu0 0.0
      %814 = vmatprep.subr.mxu0 0.0
      %815 = vmatpush1.msra.mxu0 0.0
      %816 = vmatprep.subr.mxu0 0.0
      %817 = vmatpush1.msra.mxu0 0.0
      %818 = vmatprep.subr.mxu0 0.0
      %819 = vmatpush1.msra.mxu0 0.0
      %820 = vmatprep.subr.mxu0 0.0
      %821 = vmatpush1.msra.mxu0 0.0
      %822 = vmatprep.subr.mxu0 0.0
      %823 = vmatpush1.msra.mxu0 0.0
      %824 = vmatprep.subr.mxu0 0.0
      %825 = vmatpush1.msra.mxu0 0.0
      %826 = vmatprep.subr.mxu0 0.0
      %827 = vmatpush1.msra.mxu0 0.0
      %828 = vmatprep.subr.mxu0 0.0
      %829 = vmatpush1.msra.mxu0 0.0
      %830 = vmatprep.subr.mxu0 0.0
      %831 = vmatpush1.msra.mxu0 0.0
      %832 = vmatprep.subr.mxu0 0.0
      %833 = vmatpush1.msra.mxu0 0.0
      %834 = vmatprep.subr.mxu0 0.0
      %835 = vmatpush1.msra.mxu0 0.0
      %836 = vmatprep.subr.mxu0 0.0
      %837 = vmatpush1.msra.mxu0 0.0
      %838 = vmatprep.subr.mxu0 0.0
      %839 = vmatpush1.msra.mxu0 0.0
      %840 = vmatprep.subr.mxu0 0.0
      %841 = vmatpush1.msra.mxu0 0.0
      %842 = vmatprep.subr.mxu0 0.0
      %843 = vmatpush1.msra.mxu0 0.0
      %844 = vmatprep.mubr.f32.mxu0 0.0
      %v845 = vand.u32 %v773, 4294901760
      %v846 = vsub.f32 %v773, %v845
      %v847 = vand.u32 %v846, 4294901760
      %v848 = vsub.f32 %v846, %v847
      %v849 = vand.u32 %v848, 4294901760
      %850 = vmatmul.mubr.f32.gmra.mrb[0].mxu0 %v849
      %v851 = vpop.f32.mrb[0].mxu0
      %v852 = vadd.f32 %v770, %v851
      %v853 = vpop.f32.mrb[0].mxu0
      %854 = vdwg.mxu0
      %855 = vmatprep.subr.mxu0 0.0
      %v856 = vand.u32 %v777, 4294901760
      %v857 = vsub.f32 %v777, %v856
      %v858 = vand.u32 %v857, 4294901760
      %v859 = vsub.f32 %v857, %v858
      %v860 = vand.u32 %v859, 4294901760
      %861 = vmatpush1.msra.mxu0 %v860
      %862 = vmatprep.subr.mxu0 0.0
      %863 = vmatpush1.msra.mxu0 0.0
      %864 = vmatprep.subr.mxu0 0.0
      %865 = vmatpush1.msra.mxu0 0.0
      %866 = vmatprep.subr.mxu0 0.0
      %867 = vmatpush1.msra.mxu0 0.0
      %868 = vmatprep.subr.mxu0 0.0
      %869 = vmatpush1.msra.mxu0 0.0
      %870 = vmatprep.subr.mxu0 0.0
      %871 = vmatpush1.msra.mxu0 0.0
      %872 = vmatprep.subr.mxu0 0.0
      %873 = vmatpush1.msra.mxu0 0.0
      %874 = vmatprep.subr.mxu0 0.0
      %875 = vmatpush1.msra.mxu0 0.0
      %876 = vmatprep.subr.mxu0 0.0
      %877 = vmatpush1.msra.mxu0 0.0
      %878 = vmatprep.subr.mxu0 0.0
      %879 = vmatpush1.msra.mxu0 0.0
      %880 = vmatprep.subr.mxu0 0.0
      %881 = vmatpush1.msra.mxu0 0.0
      %882 = vmatprep.subr.mxu0 0.0
      %883 = vmatpush1.msra.mxu0 0.0
      %884 = vmatprep.subr.mxu0 0.0
      %885 = vmatpush1.msra.mxu0 0.0
      %886 = vmatprep.subr.mxu0 0.0
      %887 = vmatpush1.msra.mxu0 0.0
      %888 = vmatprep.subr.mxu0 0.0
      %889 = vmatpush1.msra.mxu0 0.0
      %890 = vmatprep.subr.mxu0 0.0
      %891 = vmatpush1.msra.mxu0 0.0
      %892 = vmatprep.subr.mxu0 0.0
      %893 = vmatpush1.msra.mxu0 0.0
      %894 = vmatprep.subr.mxu0 0.0
      %895 = vmatpush1.msra.mxu0 0.0
      %896 = vmatprep.subr.mxu0 0.0
      %897 = vmatpush1.msra.mxu0 0.0
      %898 = vmatprep.subr.mxu0 0.0
      %899 = vmatpush1.msra.mxu0 0.0
      %900 = vmatprep.subr.mxu0 0.0
      %901 = vmatpush1.msra.mxu0 0.0
      %902 = vmatprep.subr.mxu0 0.0
      %903 = vmatpush1.msra.mxu0 0.0
      %904 = vmatprep.subr.mxu0 0.0
      %905 = vmatpush1.msra.mxu0 0.0
      %906 = vmatprep.subr.mxu0 0.0
      %907 = vmatpush1.msra.mxu0 0.0
      %908 = vmatprep.subr.mxu0 0.0
      %909 = vmatpush1.msra.mxu0 0.0
      %910 = vmatprep.subr.mxu0 0.0
      %911 = vmatpush1.msra.mxu0 0.0
      %912 = vmatprep.subr.mxu0 0.0
      %913 = vmatpush1.msra.mxu0 0.0
      %914 = vmatprep.subr.mxu0 0.0
      %915 = vmatpush1.msra.mxu0 0.0
      %916 = vmatprep.subr.mxu0 0.0
      %917 = vmatpush1.msra.mxu0 0.0
      %918 = vmatprep.subr.mxu0 0.0
      %919 = vmatpush1.msra.mxu0 0.0
      %920 = vmatprep.subr.mxu0 0.0
      %921 = vmatpush1.msra.mxu0 0.0
      %922 = vmatprep.subr.mxu0 0.0
      %923 = vmatpush1.msra.mxu0 0.0
      %924 = vmatprep.mubr.f32.mxu0 0.0
      %v925 = vand.u32 %v773, 4294901760
      %926 = vmatmul.mubr.f32.gmra.mrb[0].mxu0 %v925
      %v927 = vpop.f32.mrb[0].mxu0
      %v928 = vadd.f32 %v852, %v927
      %v929 = vpop.f32.mrb[0].mxu0
      %930 = vdwg.mxu0
      %931 = vmatprep.subr.mxu0 0.0
      %v932 = vand.u32 %v777, 4294901760
      %v933 = vsub.f32 %v777, %v932
      %934 = vmatpush1.msra.mxu0 %v933
      %935 = vmatprep.subr.mxu0 0.0
      %936 = vmatpush1.msra.mxu0 0.0
      %937 = vmatprep.subr.mxu0 0.0
      %938 = vmatpush1.msra.mxu0 0.0
      %939 = vmatprep.subr.mxu0 0.0
      %940 = vmatpush1.msra.mxu0 0.0
      %941 = vmatprep.subr.mxu0 0.0
      %942 = vmatpush1.msra.mxu0 0.0
      %943 = vmatprep.subr.mxu0 0.0
      %944 = vmatpush1.msra.mxu0 0.0
      %945 = vmatprep.subr.mxu0 0.0
      %946 = vmatpush1.msra.mxu0 0.0
      %947 = vmatprep.subr.mxu0 0.0
      %948 = vmatpush1.msra.mxu0 0.0
      %949 = vmatprep.subr.mxu0 0.0
      %950 = vmatpush1.msra.mxu0 0.0
      %951 = vmatprep.subr.mxu0 0.0
      %952 = vmatpush1.msra.mxu0 0.0
      %953 = vmatprep.subr.mxu0 0.0
      %954 = vmatpush1.msra.mxu0 0.0
      %955 = vmatprep.subr.mxu0 0.0
      %956 = vmatpush1.msra.mxu0 0.0
      %957 = vmatprep.subr.mxu0 0.0
      %958 = vmatpush1.msra.mxu0 0.0
      %959 = vmatprep.subr.mxu0 0.0
      %960 = vmatpush1.msra.mxu0 0.0
      %961 = vmatprep.subr.mxu0 0.0
      %962 = vmatpush1.msra.mxu0 0.0
      %963 = vmatprep.subr.mxu0 0.0
      %964 = vmatpush1.msra.mxu0 0.0
      %965 = vmatprep.subr.mxu0 0.0
      %966 = vmatpush1.msra.mxu0 0.0
      %967 = vmatprep.subr.mxu0 0.0
      %968 = vmatpush1.msra.mxu0 0.0
      %969 = vmatprep.subr.mxu0 0.0
      %970 = vmatpush1.msra.mxu0 0.0
      %971 = vmatprep.subr.mxu0 0.0
      %972 = vmatpush1.msra.mxu0 0.0
      %973 = vmatprep.subr.mxu0 0.0
      %974 = vmatpush1.msra.mxu0 0.0
      %975 = vmatprep.subr.mxu0 0.0
      %976 = vmatpush1.msra.mxu0 0.0
      %977 = vmatprep.subr.mxu0 0.0
      %978 = vmatpush1.msra.mxu0 0.0
      %979 = vmatprep.subr.mxu0 0.0
      %980 = vmatpush1.msra.mxu0 0.0
      %981 = vmatprep.subr.mxu0 0.0
      %982 = vmatpush1.msra.mxu0 0.0
      %983 = vmatprep.subr.mxu0 0.0
      %984 = vmatpush1.msra.mxu0 0.0
      %985 = vmatprep.subr.mxu0 0.0
      %986 = vmatpush1.msra.mxu0 0.0
      %987 = vmatprep.subr.mxu0 0.0
      %988 = vmatpush1.msra.mxu0 0.0
      %989 = vmatprep.subr.mxu0 0.0
      %990 = vmatpush1.msra.mxu0 0.0
      %991 = vmatprep.subr.mxu0 0.0
      %992 = vmatpush1.msra.mxu0 0.0
      %993 = vmatprep.subr.mxu0 0.0
      %994 = vmatpush1.msra.mxu0 0.0
      %995 = vmatprep.subr.mxu0 0.0
      %996 = vmatpush1.msra.mxu0 0.0
      %997 = vmatprep.mubr.f32.mxu0 0.0
      %v998 = vand.u32 %v773, 4294901760
      %v999 = vsub.f32 %v773, %v998
      %1000 = vmatmul.mubr.f32.gmra.mrb[0].mxu0 %v999
      %v1001 = vpop.f32.mrb[0].mxu0
      %v1002 = vadd.f32 %v928, %v1001
      %v1003 = vpop.f32.mrb[0].mxu0
      %1004 = vdwg.mxu0
      %1005 = vmatprep.subr.mxu0 0.0
      %v1006 = vand.u32 %v777, 4294901760
      %1007 = vmatpush1.msra.mxu0 %v1006
      %1008 = vmatprep.subr.mxu0 0.0
      %1009 = vmatpush1.msra.mxu0 0.0
      %1010 = vmatprep.subr.mxu0 0.0
      %1011 = vmatpush1.msra.mxu0 0.0
      %1012 = vmatprep.subr.mxu0 0.0
      %1013 = vmatpush1.msra.mxu0 0.0
      %1014 = vmatprep.subr.mxu0 0.0
      %1015 = vmatpush1.msra.mxu0 0.0
      %1016 = vmatprep.subr.mxu0 0.0
      %1017 = vmatpush1.msra.mxu0 0.0
      %1018 = vmatprep.subr.mxu0 0.0
      %1019 = vmatpush1.msra.mxu0 0.0
      %1020 = vmatprep.subr.mxu0 0.0
      %1021 = vmatpush1.msra.mxu0 0.0
      %1022 = vmatprep.subr.mxu0 0.0
      %1023 = vmatpush1.msra.mxu0 0.0
      %1024 = vmatprep.subr.mxu0 0.0
      %1025 = vmatpush1.msra.mxu0 0.0
      %1026 = vmatprep.subr.mxu0 0.0
      %1027 = vmatpush1.msra.mxu0 0.0
      %1028 = vmatprep.subr.mxu0 0.0
      %1029 = vmatpush1.msra.mxu0 0.0
      %1030 = vmatprep.subr.mxu0 0.0
      %1031 = vmatpush1.msra.mxu0 0.0
      %1032 = vmatprep.subr.mxu0 0.0
      %1033 = vmatpush1.msra.mxu0 0.0
      %1034 = vmatprep.subr.mxu0 0.0
      %1035 = vmatpush1.msra.mxu0 0.0
      %1036 = vmatprep.subr.mxu0 0.0
      %1037 = vmatpush1.msra.mxu0 0.0
      %1038 = vmatprep.subr.mxu0 0.0
      %1039 = vmatpush1.msra.mxu0 0.0
      %1040 = vmatprep.subr.mxu0 0.0
      %1041 = vmatpush1.msra.mxu0 0.0
      %1042 = vmatprep.subr.mxu0 0.0
      %1043 = vmatpush1.msra.mxu0 0.0
      %1044 = vmatprep.subr.mxu0 0.0
      %1045 = vmatpush1.msra.mxu0 0.0
      %1046 = vmatprep.subr.mxu0 0.0
      %1047 = vmatpush1.msra.mxu0 0.0
      %1048 = vmatprep.subr.mxu0 0.0
      %1049 = vmatpush1.msra.mxu0 0.0
      %1050 = vmatprep.subr.mxu0 0.0
      %1051 = vmatpush1.msra.mxu0 0.0
      %1052 = vmatprep.subr.mxu0 0.0
      %1053 = vmatpush1.msra.mxu0 0.0
      %1054 = vmatprep.subr.mxu0 0.0
      %1055 = vmatpush1.msra.mxu0 0.0
      %1056 = vmatprep.subr.mxu0 0.0
      %1057 = vmatpush1.msra.mxu0 0.0
      %1058 = vmatprep.subr.mxu0 0.0
      %1059 = vmatpush1.msra.mxu0 0.0
      %1060 = vmatprep.subr.mxu0 0.0
      %1061 = vmatpush1.msra.mxu0 0.0
      %1062 = vmatprep.subr.mxu0 0.0
      %1063 = vmatpush1.msra.mxu0 0.0
      %1064 = vmatprep.subr.mxu0 0.0
      %1065 = vmatpush1.msra.mxu0 0.0
      %1066 = vmatprep.subr.mxu0 0.0
      %1067 = vmatpush1.msra.mxu0 0.0
      %1068 = vmatprep.subr.mxu0 0.0
      %1069 = vmatpush1.msra.mxu0 0.0
      %1070 = vmatprep.mubr.f32.mxu0 0.0
      %v1071 = vand.u32 %v773, 4294901760
      %v1072 = vsub.f32 %v773, %v1071
      %v1073 = vand.u32 %v1072, 4294901760
      %1074 = vmatmul.mubr.f32.gmra.mrb[0].mxu0 %v1073
      %v1075 = vpop.f32.mrb[0].mxu0
      %v1076 = vadd.f32 %v1002, %v1075
      %v1077 = vpop.f32.mrb[0].mxu0
      %1078 = vdwg.mxu0
      %1079 = vmatprep.subr.mxu0 0.0
      %v1080 = vand.u32 %v777, 4294901760
      %v1081 = vsub.f32 %v777, %v1080
      %v1082 = vand.u32 %v1081, 4294901760
      %1083 = vmatpush1.msra.mxu0 %v1082
      %1084 = vmatprep.subr.mxu0 0.0
      %1085 = vmatpush1.msra.mxu0 0.0
      %1086 = vmatprep.subr.mxu0 0.0
      %1087 = vmatpush1.msra.mxu0 0.0
      %1088 = vmatprep.subr.mxu0 0.0
      %1089 = vmatpush1.msra.mxu0 0.0
      %1090 = vmatprep.subr.mxu0 0.0
      %1091 = vmatpush1.msra.mxu0 0.0
      %1092 = vmatprep.subr.mxu0 0.0
      %1093 = vmatpush1.msra.mxu0 0.0
      %1094 = vmatprep.subr.mxu0 0.0
      %1095 = vmatpush1.msra.mxu0 0.0
      %1096 = vmatprep.subr.mxu0 0.0
      %1097 = vmatpush1.msra.mxu0 0.0
      %1098 = vmatprep.subr.mxu0 0.0
      %1099 = vmatpush1.msra.mxu0 0.0
      %1100 = vmatprep.subr.mxu0 0.0
      %1101 = vmatpush1.msra.mxu0 0.0
      %1102 = vmatprep.subr.mxu0 0.0
      %1103 = vmatpush1.msra.mxu0 0.0
      %1104 = vmatprep.subr.mxu0 0.0
      %1105 = vmatpush1.msra.mxu0 0.0
      %1106 = vmatprep.subr.mxu0 0.0
      %1107 = vmatpush1.msra.mxu0 0.0
      %1108 = vmatprep.subr.mxu0 0.0
      %1109 = vmatpush1.msra.mxu0 0.0
      %1110 = vmatprep.subr.mxu0 0.0
      %1111 = vmatpush1.msra.mxu0 0.0
      %1112 = vmatprep.subr.mxu0 0.0
      %1113 = vmatpush1.msra.mxu0 0.0
      %1114 = vmatprep.subr.mxu0 0.0
      %1115 = vmatpush1.msra.mxu0 0.0
      %1116 = vmatprep.subr.mxu0 0.0
      %1117 = vmatpush1.msra.mxu0 0.0
      %1118 = vmatprep.subr.mxu0 0.0
      %1119 = vmatpush1.msra.mxu0 0.0
      %1120 = vmatprep.subr.mxu0 0.0
      %1121 = vmatpush1.msra.mxu0 0.0
      %1122 = vmatprep.subr.mxu0 0.0
      %1123 = vmatpush1.msra.mxu0 0.0
      %1124 = vmatprep.subr.mxu0 0.0
      %1125 = vmatpush1.msra.mxu0 0.0
      %1126 = vmatprep.subr.mxu0 0.0
      %1127 = vmatpush1.msra.mxu0 0.0
      %1128 = vmatprep.subr.mxu0 0.0
      %1129 = vmatpush1.msra.mxu0 0.0
      %1130 = vmatprep.subr.mxu0 0.0
      %1131 = vmatpush1.msra.mxu0 0.0
      %1132 = vmatprep.subr.mxu0 0.0
      %1133 = vmatpush1.msra.mxu0 0.0
      %1134 = vmatprep.subr.mxu0 0.0
      %1135 = vmatpush1.msra.mxu0 0.0
      %1136 = vmatprep.subr.mxu0 0.0
      %1137 = vmatpush1.msra.mxu0 0.0
      %1138 = vmatprep.subr.mxu0 0.0
      %1139 = vmatpush1.msra.mxu0 0.0
      %1140 = vmatprep.subr.mxu0 0.0
      %1141 = vmatpush1.msra.mxu0 0.0
      %1142 = vmatprep.subr.mxu0 0.0
      %1143 = vmatpush1.msra.mxu0 0.0
      %1144 = vmatprep.subr.mxu0 0.0
      %1145 = vmatpush1.msra.mxu0 0.0
      %1146 = vmatprep.mubr.f32.mxu0 0.0
      %v1147 = vand.u32 %v773, 4294901760
      %1148 = vmatmul.mubr.f32.gmra.mrb[0].mxu0 %v1147
      %v1149 = vpop.f32.mrb[0].mxu0
      %v1150 = vadd.f32 %v1076, %v1149
      %v1151 = vpop.f32.mrb[0].mxu0
      %1152 = vdwg.mxu0
      %1153 = vmatprep.subr.mxu0 0.0
      %v1154 = vand.u32 %v777, 4294901760
      %1155 = vmatpush1.msra.mxu0 %v1154
      %1156 = vmatprep.subr.mxu0 0.0
      %1157 = vmatpush1.msra.mxu0 0.0
      %1158 = vmatprep.subr.mxu0 0.0
      %1159 = vmatpush1.msra.mxu0 0.0
      %1160 = vmatprep.subr.mxu0 0.0
      %1161 = vmatpush1.msra.mxu0 0.0
      %1162 = vmatprep.subr.mxu0 0.0
      %1163 = vmatpush1.msra.mxu0 0.0
      %1164 = vmatprep.subr.mxu0 0.0
      %1165 = vmatpush1.msra.mxu0 0.0
      %1166 = vmatprep.subr.mxu0 0.0
      %1167 = vmatpush1.msra.mxu0 0.0
      %1168 = vmatprep.subr.mxu0 0.0
      %1169 = vmatpush1.msra.mxu0 0.0
      %1170 = vmatprep.subr.mxu0 0.0
      %1171 = vmatpush1.msra.mxu0 0.0
      %1172 = vmatprep.subr.mxu0 0.0
      %1173 = vmatpush1.msra.mxu0 0.0
      %1174 = vmatprep.subr.mxu0 0.0
      %1175 = vmatpush1.msra.mxu0 0.0
      %1176 = vmatprep.subr.mxu0 0.0
      %1177 = vmatpush1.msra.mxu0 0.0
      %1178 = vmatprep.subr.mxu0 0.0
      %1179 = vmatpush1.msra.mxu0 0.0
      %1180 = vmatprep.subr.mxu0 0.0
      %1181 = vmatpush1.msra.mxu0 0.0
      %1182 = vmatprep.subr.mxu0 0.0
      %1183 = vmatpush1.msra.mxu0 0.0
      %1184 = vmatprep.subr.mxu0 0.0
      %1185 = vmatpush1.msra.mxu0 0.0
      %1186 = vmatprep.subr.mxu0 0.0
      %1187 = vmatpush1.msra.mxu0 0.0
      %1188 = vmatprep.subr.mxu0 0.0
      %1189 = vmatpush1.msra.mxu0 0.0
      %1190 = vmatprep.subr.mxu0 0.0
      %1191 = vmatpush1.msra.mxu0 0.0
      %1192 = vmatprep.subr.mxu0 0.0
      %1193 = vmatpush1.msra.mxu0 0.0
      %1194 = vmatprep.subr.mxu0 0.0
      %1195 = vmatpush1.msra.mxu0 0.0
      %1196 = vmatprep.subr.mxu0 0.0
      %1197 = vmatpush1.msra.mxu0 0.0
      %1198 = vmatprep.subr.mxu0 0.0
      %1199 = vmatpush1.msra.mxu0 0.0
      %1200 = vmatprep.subr.mxu0 0.0
      %1201 = vmatpush1.msra.mxu0 0.0
      %1202 = vmatprep.subr.mxu0 0.0
      %1203 = vmatpush1.msra.mxu0 0.0
      %1204 = vmatprep.subr.mxu0 0.0
      %1205 = vmatpush1.msra.mxu0 0.0
      %1206 = vmatprep.subr.mxu0 0.0
      %1207 = vmatpush1.msra.mxu0 0.0
      %1208 = vmatprep.subr.mxu0 0.0
      %1209 = vmatpush1.msra.mxu0 0.0
      %1210 = vmatprep.subr.mxu0 0.0
      %1211 = vmatpush1.msra.mxu0 0.0
      %1212 = vmatprep.subr.mxu0 0.0
      %1213 = vmatpush1.msra.mxu0 0.0
      %1214 = vmatprep.subr.mxu0 0.0
      %1215 = vmatpush1.msra.mxu0 0.0
      %1216 = vmatprep.subr.mxu0 0.0
      %1217 = vmatpush1.msra.mxu0 0.0
      %1218 = vmatprep.mubr.f32.mxu0 0.0
      %v1219 = vand.u32 %v773, 4294901760
      %1220 = vmatmul.mubr.f32.gmra.mrb[0].mxu0 %v1219
      %v1221 = vpop.f32.mrb[0].mxu0
      %v1222 = vadd.f32 %v1150, %v1221
      %v1223 = vpop.f32.mrb[0].mxu0
      %1224 = vdwg.mxu0
      %1226 = vrot.lane.b32.xlu0 %v1222, 127
      %v1227 = vpop.permute.xlu0 %1226
      %v1229 = vadd.f32 %v1222, %v1227
      %v1230 = vxor.u32 %v1229, 2147483648
      %v1231 = vmul.f32 %v1230, 1.442695
      %v1232 = vpow.pop %v1231
      %v1233 = vadd.f32 %v1232, 1.0
      %v1234 = vrcp.pop %v1233
      %v1235 = vmul.f32 1.0, %v1234
      %v1236 = vld [vmem:[%s5] sm:$0x1]
      %s1237 = sld [smem:[#allocation3]]
      %v1238 = vstv %s1237
      %v1240 = vsel %vm311, %v1236, 0
      %v1242 = vsel %vm286, %v282, 0
      %v1244 = vsel %vm286, %v284, 0
      %v1246 = vand.u32 %v1244, 4294901760
      %1247 = vmatprep.subr.mxu0 %v1246
      %v1248 = vand.u32 %v1242, 4294901760
      %1249 = vmatpush1.msra.mxu0 %v1248
      %1250 = vmatprep.subr.mxu0 0.0
      %1251 = vmatpush1.msra.mxu0 0.0
      %1252 = vmatprep.subr.mxu0 0.0
      %1253 = vmatpush1.msra.mxu0 0.0
      %1254 = vmatprep.subr.mxu0 0.0
      %1255 = vmatpush1.msra.mxu0 0.0
      %1256 = vmatprep.subr.mxu0 0.0
      %1257 = vmatpush1.msra.mxu0 0.0
      %1258 = vmatprep.subr.mxu0 0.0
      %1259 = vmatpush1.msra.mxu0 0.0
      %1260 = vmatprep.subr.mxu0 0.0
      %1261 = vmatpush1.msra.mxu0 0.0
      %1262 = vmatprep.subr.mxu0 0.0
      %1263 = vmatpush1.msra.mxu0 0.0
      %1264 = vmatprep.subr.mxu0 0.0
      %1265 = vmatpush1.msra.mxu0 0.0
      %1266 = vmatprep.subr.mxu0 0.0
      %1267 = vmatpush1.msra.mxu0 0.0
      %1268 = vmatprep.subr.mxu0 0.0
      %1269 = vmatpush1.msra.mxu0 0.0
      %1270 = vmatprep.subr.mxu0 0.0
      %1271 = vmatpush1.msra.mxu0 0.0
      %1272 = vmatprep.subr.mxu0 0.0
      %1273 = vmatpush1.msra.mxu0 0.0
      %1274 = vmatprep.subr.mxu0 0.0
      %1275 = vmatpush1.msra.mxu0 0.0
      %1276 = vmatprep.subr.mxu0 0.0
      %1277 = vmatpush1.msra.mxu0 0.0
      %1278 = vmatprep.subr.mxu0 0.0
      %1279 = vmatpush1.msra.mxu0 0.0
      %1280 = vmatprep.subr.mxu0 0.0
      %1281 = vmatpush1.msra.mxu0 0.0
      %1282 = vmatprep.subr.mxu0 0.0
      %1283 = vmatpush1.msra.mxu0 0.0
      %1284 = vmatprep.subr.mxu0 0.0
      %1285 = vmatpush1.msra.mxu0 0.0
      %1286 = vmatprep.subr.mxu0 0.0
      %1287 = vmatpush1.msra.mxu0 0.0
      %1288 = vmatprep.subr.mxu0 0.0
      %1289 = vmatpush1.msra.mxu0 0.0
      %1290 = vmatprep.subr.mxu0 0.0
      %1291 = vmatpush1.msra.mxu0 0.0
      %1292 = vmatprep.subr.mxu0 0.0
      %1293 = vmatpush1.msra.mxu0 0.0
      %1294 = vmatprep.subr.mxu0 0.0
      %1295 = vmatpush1.msra.mxu0 0.0
      %1296 = vmatprep.subr.mxu0 0.0
      %1297 = vmatpush1.msra.mxu0 0.0
      %1298 = vmatprep.subr.mxu0 0.0
      %1299 = vmatpush1.msra.mxu0 0.0
      %1300 = vmatprep.subr.mxu0 0.0
      %1301 = vmatpush1.msra.mxu0 0.0
      %1302 = vmatprep.subr.mxu0 0.0
      %1303 = vmatpush1.msra.mxu0 0.0
      %1304 = vmatprep.subr.mxu0 0.0
      %1305 = vmatpush1.msra.mxu0 0.0
      %1306 = vmatprep.subr.mxu0 0.0
      %1307 = vmatpush1.msra.mxu0 0.0
      %1308 = vmatprep.subr.mxu0 0.0
      %1309 = vmatpush1.msra.mxu0 0.0
      %1310 = vmatprep.subr.mxu0 0.0
      %1311 = vmatpush1.msra.mxu0 0.0
      %1312 = vmatprep.mubr.f32.mxu0 0.0
      %v1313 = vand.u32 %v1240, 4294901760
      %v1314 = vsub.f32 %v1240, %v1313
      %v1315 = vand.u32 %v1314, 4294901760
      %v1316 = vsub.f32 %v1314, %v1315
      %v1317 = vand.u32 %v1316, 4294901760
      %1318 = vmatmul.mubr.f32.gmra.mrb[0].mxu0 %v1317
      %v1319 = vpop.f32.mrb[0].mxu0
      %v1320 = vadd.f32 %v1238, %v1319
      %v1321 = vpop.f32.mrb[0].mxu0
      %v1322 = vadd.f32 %v1238, %v1321
      %1323 = vdwg.mxu0
      %v1324 = vand.u32 %v1244, 4294901760
      %v1325 = vsub.f32 %v1244, %v1324
      %v1326 = vand.u32 %v1325, 4294901760
      %v1327 = vsub.f32 %v1325, %v1326
      %v1328 = vand.u32 %v1327, 4294901760
      %1329 = vmatprep.subr.mxu0 %v1328
      %v1330 = vand.u32 %v1242, 4294901760
      %v1331 = vsub.f32 %v1242, %v1330
      %v1332 = vand.u32 %v1331, 4294901760
      %v1333 = vsub.f32 %v1331, %v1332
      %v1334 = vand.u32 %v1333, 4294901760
      %1335 = vmatpush1.msra.mxu0 %v1334
      %1336 = vmatprep.subr.mxu0 0.0
      %1337 = vmatpush1.msra.mxu0 0.0
      %1338 = vmatprep.subr.mxu0 0.0
      %1339 = vmatpush1.msra.mxu0 0.0
      %1340 = vmatprep.subr.mxu0 0.0
      %1341 = vmatpush1.msra.mxu0 0.0
      %1342 = vmatprep.subr.mxu0 0.0
      %1343 = vmatpush1.msra.mxu0 0.0
      %1344 = vmatprep.subr.mxu0 0.0
      %1345 = vmatpush1.msra.mxu0 0.0
      %1346 = vmatprep.subr.mxu0 0.0
      %1347 = vmatpush1.msra.mxu0 0.0
      %1348 = vmatprep.subr.mxu0 0.0
      %1349 = vmatpush1.msra.mxu0 0.0
      %1350 = vmatprep.subr.mxu0 0.0
      %1351 = vmatpush1.msra.mxu0 0.0
      %1352 = vmatprep.subr.mxu0 0.0
      %1353 = vmatpush1.msra.mxu0 0.0
      %1354 = vmatprep.subr.mxu0 0.0
      %1355 = vmatpush1.msra.mxu0 0.0
      %1356 = vmatprep.subr.mxu0 0.0
      %1357 = vmatpush1.msra.mxu0 0.0
      %1358 = vmatprep.subr.mxu0 0.0
      %1359 = vmatpush1.msra.mxu0 0.0
      %1360 = vmatprep.subr.mxu0 0.0
      %1361 = vmatpush1.msra.mxu0 0.0
      %1362 = vmatprep.subr.mxu0 0.0
      %1363 = vmatpush1.msra.mxu0 0.0
      %1364 = vmatprep.subr.mxu0 0.0
      %1365 = vmatpush1.msra.mxu0 0.0
      %1366 = vmatprep.subr.mxu0 0.0
      %1367 = vmatpush1.msra.mxu0 0.0
      %1368 = vmatprep.subr.mxu0 0.0
      %1369 = vmatpush1.msra.mxu0 0.0
      %1370 = vmatprep.subr.mxu0 0.0
      %1371 = vmatpush1.msra.mxu0 0.0
      %1372 = vmatprep.subr.mxu0 0.0
      %1373 = vmatpush1.msra.mxu0 0.0
      %1374 = vmatprep.subr.mxu0 0.0
      %1375 = vmatpush1.msra.mxu0 0.0
      %1376 = vmatprep.subr.mxu0 0.0
      %1377 = vmatpush1.msra.mxu0 0.0
      %1378 = vmatprep.subr.mxu0 0.0
      %1379 = vmatpush1.msra.mxu0 0.0
      %1380 = vmatprep.subr.mxu0 0.0
      %1381 = vmatpush1.msra.mxu0 0.0
      %1382 = vmatprep.subr.mxu0 0.0
      %1383 = vmatpush1.msra.mxu0 0.0
      %1384 = vmatprep.subr.mxu0 0.0
      %1385 = vmatpush1.msra.mxu0 0.0
      %1386 = vmatprep.subr.mxu0 0.0
      %1387 = vmatpush1.msra.mxu0 0.0
      %1388 = vmatprep.subr.mxu0 0.0
      %1389 = vmatpush1.msra.mxu0 0.0
      %1390 = vmatprep.subr.mxu0 0.0
      %1391 = vmatpush1.msra.mxu0 0.0
      %1392 = vmatprep.subr.mxu0 0.0
      %1393 = vmatpush1.msra.mxu0 0.0
      %1394 = vmatprep.subr.mxu0 0.0
      %1395 = vmatpush1.msra.mxu0 0.0
      %1396 = vmatprep.subr.mxu0 0.0
      %1397 = vmatpush1.msra.mxu0 0.0
      %1398 = vmatprep.mubr.f32.mxu0 0.0
      %v1399 = vand.u32 %v1240, 4294901760
      %1400 = vmatmul.mubr.f32.gmra.mrb[0].mxu0 %v1399
      %v1401 = vpop.f32.mrb[0].mxu0
      %v1402 = vadd.f32 %v1320, %v1401
      %v1403 = vpop.f32.mrb[0].mxu0
      %v1404 = vadd.f32 %v1322, %v1403
      %1405 = vdwg.mxu0
      %v1406 = vand.u32 %v1244, 4294901760
      %v1407 = vsub.f32 %v1244, %v1406
      %1408 = vmatprep.subr.mxu0 %v1407
      %v1409 = vand.u32 %v1242, 4294901760
      %v1410 = vsub.f32 %v1242, %v1409
      %1411 = vmatpush1.msra.mxu0 %v1410
      %1412 = vmatprep.subr.mxu0 0.0
      %1413 = vmatpush1.msra.mxu0 0.0
      %1414 = vmatprep.subr.mxu0 0.0
      %1415 = vmatpush1.msra.mxu0 0.0
      %1416 = vmatprep.subr.mxu0 0.0
      %1417 = vmatpush1.msra.mxu0 0.0
      %1418 = vmatprep.subr.mxu0 0.0
      %1419 = vmatpush1.msra.mxu0 0.0
      %1420 = vmatprep.subr.mxu0 0.0
      %1421 = vmatpush1.msra.mxu0 0.0
      %1422 = vmatprep.subr.mxu0 0.0
      %1423 = vmatpush1.msra.mxu0 0.0
      %1424 = vmatprep.subr.mxu0 0.0
      %1425 = vmatpush1.msra.mxu0 0.0
      %1426 = vmatprep.subr.mxu0 0.0
      %1427 = vmatpush1.msra.mxu0 0.0
      %1428 = vmatprep.subr.mxu0 0.0
      %1429 = vmatpush1.msra.mxu0 0.0
      %1430 = vmatprep.subr.mxu0 0.0
      %1431 = vmatpush1.msra.mxu0 0.0
      %1432 = vmatprep.subr.mxu0 0.0
      %1433 = vmatpush1.msra.mxu0 0.0
      %1434 = vmatprep.subr.mxu0 0.0
      %1435 = vmatpush1.msra.mxu0 0.0
      %1436 = vmatprep.subr.mxu0 0.0
      %1437 = vmatpush1.msra.mxu0 0.0
      %1438 = vmatprep.subr.mxu0 0.0
      %1439 = vmatpush1.msra.mxu0 0.0
      %1440 = vmatprep.subr.mxu0 0.0
      %1441 = vmatpush1.msra.mxu0 0.0
      %1442 = vmatprep.subr.mxu0 0.0
      %1443 = vmatpush1.msra.mxu0 0.0
      %1444 = vmatprep.subr.mxu0 0.0
      %1445 = vmatpush1.msra.mxu0 0.0
      %1446 = vmatprep.subr.mxu0 0.0
      %1447 = vmatpush1.msra.mxu0 0.0
      %1448 = vmatprep.subr.mxu0 0.0
      %1449 = vmatpush1.msra.mxu0 0.0
      %1450 = vmatprep.subr.mxu0 0.0
      %1451 = vmatpush1.msra.mxu0 0.0
      %1452 = vmatprep.subr.mxu0 0.0
      %1453 = vmatpush1.msra.mxu0 0.0
      %1454 = vmatprep.subr.mxu0 0.0
      %1455 = vmatpush1.msra.mxu0 0.0
      %1456 = vmatprep.subr.mxu0 0.0
      %1457 = vmatpush1.msra.mxu0 0.0
      %1458 = vmatprep.subr.mxu0 0.0
      %1459 = vmatpush1.msra.mxu0 0.0
      %1460 = vmatprep.subr.mxu0 0.0
      %1461 = vmatpush1.msra.mxu0 0.0
      %1462 = vmatprep.subr.mxu0 0.0
      %1463 = vmatpush1.msra.mxu0 0.0
      %1464 = vmatprep.subr.mxu0 0.0
      %1465 = vmatpush1.msra.mxu0 0.0
      %1466 = vmatprep.subr.mxu0 0.0
      %1467 = vmatpush1.msra.mxu0 0.0
      %1468 = vmatprep.subr.mxu0 0.0
      %1469 = vmatpush1.msra.mxu0 0.0
      %1470 = vmatprep.subr.mxu0 0.0
      %1471 = vmatpush1.msra.mxu0 0.0
      %1472 = vmatprep.subr.mxu0 0.0
      %1473 = vmatpush1.msra.mxu0 0.0
      %1474 = vmatprep.mubr.f32.mxu0 0.0
      %v1475 = vand.u32 %v1240, 4294901760
      %v1476 = vsub.f32 %v1240, %v1475
      %1477 = vmatmul.mubr.f32.gmra.mrb[0].mxu0 %v1476
      %v1478 = vpop.f32.mrb[0].mxu0
      %v1479 = vadd.f32 %v1402, %v1478
      %v1480 = vpop.f32.mrb[0].mxu0
      %v1481 = vadd.f32 %v1404, %v1480
      %1482 = vdwg.mxu0
      %v1483 = vand.u32 %v1244, 4294901760
      %1484 = vmatprep.subr.mxu0 %v1483
      %v1485 = vand.u32 %v1242, 4294901760
      %1486 = vmatpush1.msra.mxu0 %v1485
      %1487 = vmatprep.subr.mxu0 0.0
      %1488 = vmatpush1.msra.mxu0 0.0
      %1489 = vmatprep.subr.mxu0 0.0
      %1490 = vmatpush1.msra.mxu0 0.0
      %1491 = vmatprep.subr.mxu0 0.0
      %1492 = vmatpush1.msra.mxu0 0.0
      %1493 = vmatprep.subr.mxu0 0.0
      %1494 = vmatpush1.msra.mxu0 0.0
      %1495 = vmatprep.subr.mxu0 0.0
      %1496 = vmatpush1.msra.mxu0 0.0
      %1497 = vmatprep.subr.mxu0 0.0
      %1498 = vmatpush1.msra.mxu0 0.0
      %1499 = vmatprep.subr.mxu0 0.0
      %1500 = vmatpush1.msra.mxu0 0.0
      %1501 = vmatprep.subr.mxu0 0.0
      %1502 = vmatpush1.msra.mxu0 0.0
      %1503 = vmatprep.subr.mxu0 0.0
      %1504 = vmatpush1.msra.mxu0 0.0
      %1505 = vmatprep.subr.mxu0 0.0
      %1506 = vmatpush1.msra.mxu0 0.0
      %1507 = vmatprep.subr.mxu0 0.0
      %1508 = vmatpush1.msra.mxu0 0.0
      %1509 = vmatprep.subr.mxu0 0.0
      %1510 = vmatpush1.msra.mxu0 0.0
      %1511 = vmatprep.subr.mxu0 0.0
      %1512 = vmatpush1.msra.mxu0 0.0
      %1513 = vmatprep.subr.mxu0 0.0
      %1514 = vmatpush1.msra.mxu0 0.0
      %1515 = vmatprep.subr.mxu0 0.0
      %1516 = vmatpush1.msra.mxu0 0.0
      %1517 = vmatprep.subr.mxu0 0.0
      %1518 = vmatpush1.msra.mxu0 0.0
      %1519 = vmatprep.subr.mxu0 0.0
      %1520 = vmatpush1.msra.mxu0 0.0
      %1521 = vmatprep.subr.mxu0 0.0
      %1522 = vmatpush1.msra.mxu0 0.0
      %1523 = vmatprep.subr.mxu0 0.0
      %1524 = vmatpush1.msra.mxu0 0.0
      %1525 = vmatprep.subr.mxu0 0.0
      %1526 = vmatpush1.msra.mxu0 0.0
      %1527 = vmatprep.subr.mxu0 0.0
      %1528 = vmatpush1.msra.mxu0 0.0
      %1529 = vmatprep.subr.mxu0 0.0
      %1530 = vmatpush1.msra.mxu0 0.0
      %1531 = vmatprep.subr.mxu0 0.0
      %1532 = vmatpush1.msra.mxu0 0.0
      %1533 = vmatprep.subr.mxu0 0.0
      %1534 = vmatpush1.msra.mxu0 0.0
      %1535 = vmatprep.subr.mxu0 0.0
      %1536 = vmatpush1.msra.mxu0 0.0
      %1537 = vmatprep.subr.mxu0 0.0
      %1538 = vmatpush1.msra.mxu0 0.0
      %1539 = vmatprep.subr.mxu0 0.0
      %1540 = vmatpush1.msra.mxu0 0.0
      %1541 = vmatprep.subr.mxu0 0.0
      %1542 = vmatpush1.msra.mxu0 0.0
      %1543 = vmatprep.subr.mxu0 0.0
      %1544 = vmatpush1.msra.mxu0 0.0
      %1545 = vmatprep.subr.mxu0 0.0
      %1546 = vmatpush1.msra.mxu0 0.0
      %1547 = vmatprep.subr.mxu0 0.0
      %1548 = vmatpush1.msra.mxu0 0.0
      %1549 = vmatprep.mubr.f32.mxu0 0.0
      %v1550 = vand.u32 %v1240, 4294901760
      %v1551 = vsub.f32 %v1240, %v1550
      %v1552 = vand.u32 %v1551, 4294901760
      %1553 = vmatmul.mubr.f32.gmra.mrb[0].mxu0 %v1552
      %v1554 = vpop.f32.mrb[0].mxu0
      %v1555 = vadd.f32 %v1479, %v1554
      %v1556 = vpop.f32.mrb[0].mxu0
      %v1557 = vadd.f32 %v1481, %v1556
      %1558 = vdwg.mxu0
      %v1559 = vand.u32 %v1244, 4294901760
      %v1560 = vsub.f32 %v1244, %v1559
      %v1561 = vand.u32 %v1560, 4294901760
      %1562 = vmatprep.subr.mxu0 %v1561
      %v1563 = vand.u32 %v1242, 4294901760
      %v1564 = vsub.f32 %v1242, %v1563
      %v1565 = vand.u32 %v1564, 4294901760
      %1566 = vmatpush1.msra.mxu0 %v1565
      %1567 = vmatprep.subr.mxu0 0.0
      %1568 = vmatpush1.msra.mxu0 0.0
      %1569 = vmatprep.subr.mxu0 0.0
      %1570 = vmatpush1.msra.mxu0 0.0
      %1571 = vmatprep.subr.mxu0 0.0
      %1572 = vmatpush1.msra.mxu0 0.0
      %1573 = vmatprep.subr.mxu0 0.0
      %1574 = vmatpush1.msra.mxu0 0.0
      %1575 = vmatprep.subr.mxu0 0.0
      %1576 = vmatpush1.msra.mxu0 0.0
      %1577 = vmatprep.subr.mxu0 0.0
      %1578 = vmatpush1.msra.mxu0 0.0
      %1579 = vmatprep.subr.mxu0 0.0
      %1580 = vmatpush1.msra.mxu0 0.0
      %1581 = vmatprep.subr.mxu0 0.0
      %1582 = vmatpush1.msra.mxu0 0.0
      %1583 = vmatprep.subr.mxu0 0.0
      %1584 = vmatpush1.msra.mxu0 0.0
      %1585 = vmatprep.subr.mxu0 0.0
      %1586 = vmatpush1.msra.mxu0 0.0
      %1587 = vmatprep.subr.mxu0 0.0
      %1588 = vmatpush1.msra.mxu0 0.0
      %1589 = vmatprep.subr.mxu0 0.0
      %1590 = vmatpush1.msra.mxu0 0.0
      %1591 = vmatprep.subr.mxu0 0.0
      %1592 = vmatpush1.msra.mxu0 0.0
      %1593 = vmatprep.subr.mxu0 0.0
      %1594 = vmatpush1.msra.mxu0 0.0
      %1595 = vmatprep.subr.mxu0 0.0
      %1596 = vmatpush1.msra.mxu0 0.0
      %1597 = vmatprep.subr.mxu0 0.0
      %1598 = vmatpush1.msra.mxu0 0.0
      %1599 = vmatprep.subr.mxu0 0.0
      %1600 = vmatpush1.msra.mxu0 0.0
      %1601 = vmatprep.subr.mxu0 0.0
      %1602 = vmatpush1.msra.mxu0 0.0
      %1603 = vmatprep.subr.mxu0 0.0
      %1604 = vmatpush1.msra.mxu0 0.0
      %1605 = vmatprep.subr.mxu0 0.0
      %1606 = vmatpush1.msra.mxu0 0.0
      %1607 = vmatprep.subr.mxu0 0.0
      %1608 = vmatpush1.msra.mxu0 0.0
      %1609 = vmatprep.subr.mxu0 0.0
      %1610 = vmatpush1.msra.mxu0 0.0
      %1611 = vmatprep.subr.mxu0 0.0
      %1612 = vmatpush1.msra.mxu0 0.0
      %1613 = vmatprep.subr.mxu0 0.0
      %1614 = vmatpush1.msra.mxu0 0.0
      %1615 = vmatprep.subr.mxu0 0.0
      %1616 = vmatpush1.msra.mxu0 0.0
      %1617 = vmatprep.subr.mxu0 0.0
      %1618 = vmatpush1.msra.mxu0 0.0
      %1619 = vmatprep.subr.mxu0 0.0
      %1620 = vmatpush1.msra.mxu0 0.0
      %1621 = vmatprep.subr.mxu0 0.0
      %1622 = vmatpush1.msra.mxu0 0.0
      %1623 = vmatprep.subr.mxu0 0.0
      %1624 = vmatpush1.msra.mxu0 0.0
      %1625 = vmatprep.subr.mxu0 0.0
      %1626 = vmatpush1.msra.mxu0 0.0
      %1627 = vmatprep.subr.mxu0 0.0
      %1628 = vmatpush1.msra.mxu0 0.0
      %1629 = vmatprep.mubr.f32.mxu0 0.0
      %v1630 = vand.u32 %v1240, 4294901760
      %1631 = vmatmul.mubr.f32.gmra.mrb[0].mxu0 %v1630
      %v1632 = vpop.f32.mrb[0].mxu0
      %v1633 = vadd.f32 %v1555, %v1632
      %v1634 = vpop.f32.mrb[0].mxu0
      %v1635 = vadd.f32 %v1557, %v1634
      %1636 = vdwg.mxu0
      %v1637 = vand.u32 %v1244, 4294901760
      %1638 = vmatprep.subr.mxu0 %v1637
      %v1639 = vand.u32 %v1242, 4294901760
      %1640 = vmatpush1.msra.mxu0 %v1639
      %1641 = vmatprep.subr.mxu0 0.0
      %1642 = vmatpush1.msra.mxu0 0.0
      %1643 = vmatprep.subr.mxu0 0.0
      %1644 = vmatpush1.msra.mxu0 0.0
      %1645 = vmatprep.subr.mxu0 0.0
      %1646 = vmatpush1.msra.mxu0 0.0
      %1647 = vmatprep.subr.mxu0 0.0
      %1648 = vmatpush1.msra.mxu0 0.0
      %1649 = vmatprep.subr.mxu0 0.0
      %1650 = vmatpush1.msra.mxu0 0.0
      %1651 = vmatprep.subr.mxu0 0.0
      %1652 = vmatpush1.msra.mxu0 0.0
      %1653 = vmatprep.subr.mxu0 0.0
      %1654 = vmatpush1.msra.mxu0 0.0
      %1655 = vmatprep.subr.mxu0 0.0
      %1656 = vmatpush1.msra.mxu0 0.0
      %1657 = vmatprep.subr.mxu0 0.0
      %1658 = vmatpush1.msra.mxu0 0.0
      %1659 = vmatprep.subr.mxu0 0.0
      %1660 = vmatpush1.msra.mxu0 0.0
      %1661 = vmatprep.subr.mxu0 0.0
      %1662 = vmatpush1.msra.mxu0 0.0
      %1663 = vmatprep.subr.mxu0 0.0
      %1664 = vmatpush1.msra.mxu0 0.0
      %1665 = vmatprep.subr.mxu0 0.0
      %1666 = vmatpush1.msra.mxu0 0.0
      %1667 = vmatprep.subr.mxu0 0.0
      %1668 = vmatpush1.msra.mxu0 0.0
      %1669 = vmatprep.subr.mxu0 0.0
      %1670 = vmatpush1.msra.mxu0 0.0
      %1671 = vmatprep.subr.mxu0 0.0
      %1672 = vmatpush1.msra.mxu0 0.0
      %1673 = vmatprep.subr.mxu0 0.0
      %1674 = vmatpush1.msra.mxu0 0.0
      %1675 = vmatprep.subr.mxu0 0.0
      %1676 = vmatpush1.msra.mxu0 0.0
      %1677 = vmatprep.subr.mxu0 0.0
      %1678 = vmatpush1.msra.mxu0 0.0
      %1679 = vmatprep.subr.mxu0 0.0
      %1680 = vmatpush1.msra.mxu0 0.0
      %1681 = vmatprep.subr.mxu0 0.0
      %1682 = vmatpush1.msra.mxu0 0.0
      %1683 = vmatprep.subr.mxu0 0.0
      %1684 = vmatpush1.msra.mxu0 0.0
      %1685 = vmatprep.subr.mxu0 0.0
      %1686 = vmatpush1.msra.mxu0 0.0
      %1687 = vmatprep.subr.mxu0 0.0
      %1688 = vmatpush1.msra.mxu0 0.0
      %1689 = vmatprep.subr.mxu0 0.0
      %1690 = vmatpush1.msra.mxu0 0.0
      %1691 = vmatprep.subr.mxu0 0.0
      %1692 = vmatpush1.msra.mxu0 0.0
      %1693 = vmatprep.subr.mxu0 0.0
      %1694 = vmatpush1.msra.mxu0 0.0
      %1695 = vmatprep.subr.mxu0 0.0
      %1696 = vmatpush1.msra.mxu0 0.0
      %1697 = vmatprep.subr.mxu0 0.0
      %1698 = vmatpush1.msra.mxu0 0.0
      %1699 = vmatprep.subr.mxu0 0.0
      %1700 = vmatpush1.msra.mxu0 0.0
      %1701 = vmatprep.subr.mxu0 0.0
      %1702 = vmatpush1.msra.mxu0 0.0
      %1703 = vmatprep.mubr.f32.mxu0 0.0
      %v1704 = vand.u32 %v1240, 4294901760
      %1705 = vmatmul.mubr.f32.gmra.mrb[0].mxu0 %v1704
      %v1706 = vpop.f32.mrb[0].mxu0
      %v1707 = vadd.f32 %v1633, %v1706
      %v1708 = vpop.f32.mrb[0].mxu0
      %v1709 = vadd.f32 %v1635, %v1708
      %1710 = vdwg.mxu0
      %v1711 = vxor.u32 %v1707, 2147483648
      %v1712 = vxor.u32 %v1709, 2147483648
      %v1713 = vmul.f32 %v1711, 1.442695
      %v1714 = vpow.pop %v1713
      %v1715 = vmul.f32 %v1712, 1.442695
      %v1716 = vpow.pop %v1715
      %v1717 = vadd.f32 %v1714, 1.0
      %v1718 = vadd.f32 %v1716, 1.0
      %v1719 = vrcp.pop %v1717
      %v1720 = vmul.f32 1.0, %v1719
      %v1721 = vrcp.pop %v1718
      %v1722 = vmul.f32 1.0, %v1721
      %1724 = vset.pattern.permute.xlu0 0
      %1725 = vperm.xlu0 %1724, %v1235
      %v1726 = vpop.permute.xlu0 %1725
      %v1728 = vunpack.c.l.s4 839922192
      %v1729 = vunpack.c.0.s8 %v1728
      %v1730 = vlaneseq
      %v1731 = vshrl.u32 %v1730, 7
      %v1732 = vsub.s32 %v1729, %v1731
      %v1733 = vrot.slane %v1726, %v1732
      %v1735 = vmul.f32 %v282, %v1733
      %v1736 = vlaneseq
      %v1737 = vshrl.u32 %v1736, 7
      %v1738 = vsub.s32 0, %v1737
      %v1739 = vrot.slane %v1720, %v1738
      %v1740 = vlaneseq
      %v1741 = vshrl.u32 %v1740, 7
      %v1742 = vsub.s32 0, %v1741
      %v1743 = vrot.slane %v1722, %v1742
      %v1746 = vcombine.low %v1739, %v1743
      %v1748 = vmul.f32 %v1735, %v1746
      %1749 = vst [vmem:[%s281] sm:$0xff] %v1748
      %p1750 = scmp.lt.s32.totalorder %s21, 1
      %s1751 = scalar_select %p1750, %s21, 1
      %s1752 = smul.addr %s1751, 2
      %s1753 = smul.addr %s1752, 4
      %s1754 = scalar_lea.vmem %s7, %s1753
      // Predicated region
      $region49: #{cbam_forward.1} parent=47 // pred_check
        %p1755 = pneg %p191
      $region50: #{cbam_forward.1} parent=47 // pred_check_branch
        %1757 = sbr.rel (%p1755) target = $region52
      $region51: #{cbam_forward.1} parent=47 // pred_region
        _
      $region52: #{cbam_forward.1} parent=47 // pred_fallthru
        _
    $region48: #{cbam_forward.1} parent=5 // pred_fallthru
      _
    %p1758 = scmp.le.s32.totalorder 2, %s16
    // Predicated region
    $region53: #{cbam_forward.1} parent=5 // pred_check
      %p1759 = pneg %p1758
    $region54: #{cbam_forward.1} parent=5 // pred_check_branch
      %1761 = sbr.rel (%p1759) target = $region56
    $region55: #{cbam_forward.1} parent=5 // pred_region
      %s1762 = ssub.s32 %s16, 2
      // Predicated region
      $region57: #{cbam_forward.1} parent=55 // pred_check
        %p1763 = pneg %p197
      $region58: #{cbam_forward.1} parent=55 // pred_check_branch
        %1765 = sbr.rel (%p1763) target = $region60
      $region59: #{cbam_forward.1} parent=55 // pred_region
        %p1766 = scmp.lt.s32.totalorder %s22, 1
        %s1767 = scalar_select %p1766, %s22, 1
        %s1768 = smul.addr %s1767, 2
        %s1769 = smul.addr %s1768, 4
        %s1770 = scalar_lea.vmem %s7, %s1769
      $region60: #{cbam_forward.1} parent=55 // pred_fallthru
        _
    $region56: #{cbam_forward.1} parent=5 // pred_fallthru
      _
  $region6: #{cbam_forward.1} parent=0 // loop_footer
    %s20 = sadd.s32 1, %s16
  $region7: #{cbam_forward.1} parent=0 // loop_footer_branch
    %15 = sbr.rel target = $region3
  $region8: #{cbam_forward.1} parent=0 // loop_exit
    _

</llo_original>
